<compile_context>
chip_gen: v5e
topology: v5e:2x2
jax: 0.10.0
libtpu: 0.0.40
codegen_flags: <defaults>
</compile_context>

<pallas_src>
import numpy as np
import jax
import jax.numpy as jnp
from jax.experimental import pallas as pl
from jax.experimental.pallas import tpu as pltpu

# ---- hyper-parameters (globals in the original file were undefined; fixed here)
NUM_SEGMENTS = 12
SCALE = 3                                # frames per group
NUM_GROUPS = NUM_SEGMENTS // SCALE       # 4
H, W = 10, 7                             # spatial size hard-coded in the module
CH, CW = H - 2, W - 2                    # 3x3 "valid" conv -> 8 x 5
IMG_FEAT = CH * CW                       # 40 == self.img_feature_dim
FEATURE_BOTTLENECK = 32
TRN_BOTTLENECK = 64
ATTENTION_DIM = 16
NUM_CLASS = 5
BN_EPS_2D = 1e-4                         # BatchNorm2d(eps=0.0001)
BN_EPS_1D = 1e-5                         # BatchNorm1d default
PAIRS = ((0, 1), (0, 2), (1, 2))         # deterministic scale-2 frame pairs
OUT_PAD = 128                            # lane-dense padded class dim


def _round_up(n, m):
    return ((n + m - 1) // m) * m


# ============================================================================
# Fused kernel: BN2d + PReLU + per-group conv + TRNmultiscale + Attention
#               + classifier + masked log_softmax        (one batch tile / step)
# ============================================================================
def fused_net_kernel(x_ref, bnp_ref, convw_ref, relw_ref, secw_ref,
                     attw_ref, ctx_ref, cls1_ref, cls2_ref, vecs_ref, out_ref):
    bt = x_ref.shape[1]                        # batch-tile rows (multiple of 8)

    def mm(a, w):                              # bf16 MXU matmul, f32 accumulation
        return jnp.dot(a.astype(jnp.bfloat16), w, preferred_element_type=jnp.float32)

    conv_w = [convw_ref[g] for g in range(NUM_GROUPS)]                   # 4 x (70,40) bf16
    conv_b = [vecs_ref[8 + g:9 + g, 0:IMG_FEAT] for g in range(NUM_GROUPS)]

    # ---- folded BatchNorm2d + PReLU + per-group 3x3 "valid" conv (im2col matmul) ----
    pos = [[], [], []]        # pos[f][g] = ReLU(conv feature) of segment 3*g+f, (bt, 40)
    for s in range(NUM_SEGMENTS):
        g, f = s // SCALE, s % SCALE
        xs = x_ref[s]                                               # (bt, 70) f32
        xs = xs * bnp_ref[0, s] + bnp_ref[1, s]                     # BN2d (eval) folded
        xs = jnp.where(xs >= 0.0, xs, bnp_ref[2, s] * xs)           # PReLU (per segment)
        feat = mm(xs, conv_w[g]) + conv_b[g]                        # Conv2d(1,1,3)
        pos[f].append(jnp.maximum(feat, 0.0))                       # fc_fusion leading ReLU

    # group-major stacks: rows [g*bt:(g+1)*bt] belong to group g        (4*bt, 40)
    a3 = jnp.concatenate(pos[0], axis=0)
    b3 = jnp.concatenate(pos[1], axis=0)
    c3 = jnp.concatenate(pos[2], axis=0)

    b31 = vecs_ref[0:1, 0:TRN_BOTTLENECK]
    b21 = vecs_ref[1:2, 0:TRN_BOTTLENECK]

    # ---- TRN scale-3 relation (weights shared across groups; group folded into M) ----
    h3 = jnp.maximum(mm(a3, relw_ref[0]) + mm(b3, relw_ref[1])
                     + mm(c3, relw_ref[2]) + b31, 0.0)              # (4*bt, 64)

    # ---- TRN scale-2 relations (all 3 deterministic frame pairs) ----
    p0a = mm(a3, relw_ref[3])
    p0b = mm(b3, relw_ref[3])
    p1b = mm(b3, relw_ref[4])
    p1c = mm(c3, relw_ref[4])
    h2sum = (jnp.maximum(p0a + p1b + b21, 0.0) +
             jnp.maximum(p0a + p1c + b21, 0.0) +
             jnp.maximum(p0b + p1c + b21, 0.0))                     # pair-sum, (4*bt, 64)

    # second (linear) fusion layers; group bias = b32 + 3*b22 folded in
    gf = (mm(h3, secw_ref[0]) + mm(h2sum, secw_ref[1])
          + vecs_ref[2:3, 0:FEATURE_BOTTLENECK])                    # (4*bt, 32)

    # ---- Attention over the 4 group features (group blocks along M) ----
    t = jnp.tanh(mm(gf, attw_ref[...]) + vecs_ref[3:4, 0:ATTENTION_DIM])   # (4*bt, 16)
    sc = mm(t, ctx_ref[...])[:, 0:1]                                       # (4*bt, 1)
    s_g = [sc[g * bt:(g + 1) * bt] for g in range(NUM_GROUPS)]
    m = s_g[0]
    for g in range(1, NUM_GROUPS):
        m = jnp.maximum(m, s_g[g])
    e_g = [jnp.exp(v - m) for v in s_g]
    denom = e_g[0]
    for g in range(1, NUM_GROUPS):
        denom = denom + e_g[g]
    inv = pl.reciprocal(denom)                                             # exact softmax
    merged = (e_g[0] * inv) * gf[0:bt]
    for g in range(1, NUM_GROUPS):
        merged = merged + (e_g[g] * inv) * gf[g * bt:(g + 1) * bt]          # (bt, 32)

    # ---- classifier (BN1d folded) + masked log_softmax on 128-lane padded classes ----
    z = jnp.maximum(mm(merged, cls1_ref[...]) + vecs_ref[4:5, 0:FEATURE_BOTTLENECK], 0.0)
    logits = mm(z, cls2_ref[...]) + vecs_ref[5:6, :]                        # (bt, 128)
    lane = jax.lax.broadcasted_iota(jnp.int32, logits.shape, 1)
    valid = lane < NUM_CLASS
    lm = jnp.where(valid, logits, jnp.float32(-1e30))
    mx = jnp.max(lm, axis=-1, keepdims=True)
    lse = jnp.log(jnp.sum(jnp.exp(lm - mx), axis=-1, keepdims=True)) + mx
    out_ref[...] = jnp.where(valid, lm - lse, 0.0)


def _resident(arr):
    nd = arr.ndim
    return pl.BlockSpec(arr.shape, lambda i, _nd=nd: (0,) * _nd)


@jax.jit
def net_forward(x, pp):
    B = x.shape[0]
    bt = 256 if B >= 256 else _round_up(B, 8)        # batch tile (rows), multiple of 8
    nb = pl.cdiv(B, bt)
    bpad = nb * bt
    # contiguous (B,12,10,7) -> segment-major (12, B, 70) so every matmul is dense
    xs = jnp.transpose(x, (1, 0, 2, 3)).reshape(NUM_SEGMENTS, B, H * W).astype(jnp.float32)
    if bpad != B:
        xs = jnp.pad(xs, ((0, 0), (0, bpad - B), (0, 0)))
    weights = (pp["bnp"], pp["convw"], pp["relw"], pp["secw"], pp["attw"],
               pp["ctx"], pp["cls1"], pp["cls2"], pp["vecs"])
    out = pl.pallas_call(
        fused_net_kernel,
        out_shape=jax.ShapeDtypeStruct((bpad, OUT_PAD), jnp.float32),
        grid=(nb,),
        in_specs=[pl.BlockSpec((NUM_SEGMENTS, bt, H * W), lambda i: (0, i, 0))]
                 + [_resident(w) for w in weights],
        out_specs=pl.BlockSpec((bt, OUT_PAD), lambda i: (i, 0)),
        compiler_params=pltpu.CompilerParams(dimension_semantics=("parallel",)),
    )(xs, *weights)
    return out[:B, :NUM_CLASS]


# ============================================================================
# Parameter construction (deterministic, synthetic) + one-time host preprocessing
# ============================================================================
def init_params(key):
    ks = jax.random.split(key, 25)

    def nrm(k, shape, scale=0.1):
        return scale * jax.random.normal(k, shape, jnp.float32)

    return dict(
        bn_gamma=1.0 + nrm(ks[0], (NUM_SEGMENTS,)),
        bn_beta=nrm(ks[1], (NUM_SEGMENTS,)),
        bn_mean=nrm(ks[2], (NUM_SEGMENTS,)),
        bn_var=jnp.abs(1.0 + nrm(ks[3], (NUM_SEGMENTS,))),
        prelu_alpha=jnp.full((NUM_SEGMENTS,), 0.25, jnp.float32),
        conv_w=nrm(ks[4], (NUM_GROUPS, 9), 0.3),          # 4 x Conv2d(1,1,3) taps
        conv_b=nrm(ks[5], (NUM_GROUPS,), 0.1),
        w31=nrm(ks[6], (SCALE * IMG_FEAT, TRN_BOTTLENECK)),
        b31=nrm(ks[7], (TRN_BOTTLENECK,)),
        w32=nrm(ks[8], (TRN_BOTTLENECK, FEATURE_BOTTLENECK)),
        b32=nrm(ks[9], (FEATURE_BOTTLENECK,)),
        w21=nrm(ks[10], (2 * IMG_FEAT, TRN_BOTTLENECK)),
        b21=nrm(ks[11], (TRN_BOTTLENECK,)),
        w22=nrm(ks[12], (TRN_BOTTLENECK, FEATURE_BOTTLENECK)),
        b22=nrm(ks[13], (FEATURE_BOTTLENECK,)),
        att_w=nrm(ks[14], (FEATURE_BOTTLENECK, ATTENTION_DIM)),
        att_b=nrm(ks[15], (ATTENTION_DIM,)),
        att_ctx=nrm(ks[16], (ATTENTION_DIM,), 1.0),
        cls_w1=nrm(ks[17], (FEATURE_BOTTLENECK, FEATURE_BOTTLENECK)),
        cls_b1=nrm(ks[18], (FEATURE_BOTTLENECK,)),
        cls_bn_gamma=1.0 + nrm(ks[19], (FEATURE_BOTTLENECK,)),
        cls_bn_beta=nrm(ks[20], (FEATURE_BOTTLENECK,)),
        cls_bn_mean=nrm(ks[21], (FEATURE_BOTTLENECK,)),
        cls_bn_var=jnp.abs(1.0 + nrm(ks[22], (FEATURE_BOTTLENECK,))),
        cls_w2=nrm(ks[23], (FEATURE_BOTTLENECK, NUM_CLASS)),
        cls_b2=nrm(ks[24], (NUM_CLASS,)),
    )


def preprocess_params(p):
    """One-time host-side fold: BN folding, dense per-group conv im2col maps,
    per-frame-position TRN weight splits, bf16 weight casts, and all small bias
    vectors packed into one lane-dense (16,128) f32 array."""
    f32 = lambda a: np.asarray(a, np.float32)

    # BatchNorm2d (eval) folded to per-segment affine + per-segment PReLU slope
    s2 = f32(p["bn_gamma"]) / np.sqrt(f32(p["bn_var"]) + BN_EPS_2D)
    t2 = f32(p["bn_beta"]) - f32(p["bn_mean"]) * s2
    bnp = np.zeros((3, NUM_SEGMENTS, 1, H * W), np.float32)
    bnp[0] = s2.reshape(-1, 1, 1)
    bnp[1] = t2.reshape(-1, 1, 1)
    bnp[2] = f32(p["prelu_alpha"]).reshape(-1, 1, 1)

    # 4 x Conv2d(1,1,3) "valid" as dense (70 -> 40) im2col maps (no block-diag zeros)
    s9 = np.zeros((9, H * W, IMG_FEAT), np.float32)
    for r in range(CH):
        for c in range(CW):
            o = r * CW + c
            for di in range(3):
                for dj in range(3):
                    s9[di * 3 + dj, (r + di) * W + (c + dj), o] = 1.0
    convw = np.einsum("gt,tio->gio", f32(p["conv_w"]), s9)           # (4, 70, 40)

    # TRN fc_fusion first layers, split per frame position (shared across groups)
    w31, w21 = f32(p["w31"]), f32(p["w21"])
    relw = np.stack([w31[0:IMG_FEAT], w31[IMG_FEAT:2 * IMG_FEAT], w31[2 * IMG_FEAT:],
                     w21[0:IMG_FEAT], w21[IMG_FEAT:]], axis=0)       # (5, 40, 64)
    secw = np.stack([f32(p["w32"]), f32(p["w22"])], axis=0)          # (2, 64, 32)

    # attention projection; context vector as a tiny matmul RHS (column 0)
    attw = f32(p["att_w"])
    ctx = np.zeros((ATTENTION_DIM, 8), np.float32)
    ctx[:, 0] = f32(p["att_ctx"])

    # classifier: fold BatchNorm1d (eval) into the first Linear; pad class dim to 128
    s1 = f32(p["cls_bn_gamma"]) / np.sqrt(f32(p["cls_bn_var"]) + BN_EPS_1D)
    t1 = f32(p["cls_bn_beta"]) - f32(p["cls_bn_mean"]) * s1
    cls1 = f32(p["cls_w1"]) * s1[None, :]
    cb1 = f32(p["cls_b1"]) * s1 + t1
    cls2 = np.zeros((FEATURE_BOTTLENECK, OUT_PAD), np.float32)
    cls2[:, :NUM_CLASS] = f32(p["cls_w2"])

    # all small bias/scale vectors packed into ONE lane-dense array (single DMA)
    vecs = np.zeros((16, OUT_PAD), np.float32)
    vecs[0, :TRN_BOTTLENECK] = f32(p["b31"])
    vecs[1, :TRN_BOTTLENECK] = f32(p["b21"])
    vecs[2, :FEATURE_BOTTLENECK] = f32(p["b32"]) + len(PAIRS) * f32(p["b22"])
    vecs[3, :ATTENTION_DIM] = f32(p["att_b"])
    vecs[4, :FEATURE_BOTTLENECK] = cb1
    vecs[5, :NUM_CLASS] = f32(p["cls_b2"])
    for g in range(NUM_GROUPS):
        vecs[8 + g, :IMG_FEAT] = f32(p["conv_b"])[g]

    bf16 = lambda a: jnp.asarray(a, jnp.bfloat16)
    return dict(
        bnp=jnp.asarray(bnp), vecs=jnp.asarray(vecs),
        convw=bf16(convw), relw=bf16(relw), secw=bf16(secw),
        attw=bf16(attw), ctx=bf16(ctx), cls1=bf16(cls1), cls2=bf16(cls2),
    )


if __name__ == "__main__":
    key = jax.random.PRNGKey(0)
    kx, kp = jax.random.split(key)
    B = 2
    x = jax.random.normal(kx, (B, NUM_SEGMENTS, H, W), jnp.float32)
    params = init_params(kp)
    pp = preprocess_params(params)          # one-time host-side fold / packing
    out = jax.block_until_ready(net_forward(x, pp))
    assert out.shape == (B, NUM_CLASS)
    assert bool(jnp.all(jnp.isfinite(out)))
    print("KERNEL_OK")
</pallas_src>

<mosaic_0001>
module attributes {stable_mosaic.version = 11 : i64} {
  func.func @fused_net_kernel(%arg0: i32, %arg1: memref<12x8x70xf32, #tpu.memory_space<vmem>>, %arg2: memref<3x12x1x70xf32, #tpu.memory_space<vmem>>, %arg3: memref<4x70x40xbf16, #tpu.memory_space<vmem>>, %arg4: memref<5x40x64xbf16, #tpu.memory_space<vmem>>, %arg5: memref<2x64x32xbf16, #tpu.memory_space<vmem>>, %arg6: memref<32x16xbf16, #tpu.memory_space<vmem>>, %arg7: memref<16x8xbf16, #tpu.memory_space<vmem>>, %arg8: memref<32x32xbf16, #tpu.memory_space<vmem>>, %arg9: memref<32x128xbf16, #tpu.memory_space<vmem>>, %arg10: memref<16x128xf32, #tpu.memory_space<vmem>>, %arg11: memref<8x128xf32, #tpu.memory_space<vmem>>) attributes {dimension_semantics = [#tpu.dimension_semantics<parallel>], iteration_bounds = array<i64: 1>, scalar_prefetch = 0 : i64, scratch_operands = 0 : i64, tpu.core_type = #tpu.core_type<tc>, window_params = [{transform_indices = @transform_0, window_bounds = array<i64: 12, 8, 70>}, {pipeline_mode = #tpu.pipeline_mode<synchronous>, transform_indices = @transform_1, window_bounds = array<i64: 3, 12, 1, 70>}, {pipeline_mode = #tpu.pipeline_mode<synchronous>, transform_indices = @transform_2, window_bounds = array<i64: 4, 70, 40>}, {pipeline_mode = #tpu.pipeline_mode<synchronous>, transform_indices = @transform_3, window_bounds = array<i64: 5, 40, 64>}, {pipeline_mode = #tpu.pipeline_mode<synchronous>, transform_indices = @transform_4, window_bounds = array<i64: 2, 64, 32>}, {pipeline_mode = #tpu.pipeline_mode<synchronous>, transform_indices = @transform_5, window_bounds = array<i64: 32, 16>}, {pipeline_mode = #tpu.pipeline_mode<synchronous>, transform_indices = @transform_6, window_bounds = array<i64: 16, 8>}, {pipeline_mode = #tpu.pipeline_mode<synchronous>, transform_indices = @transform_7, window_bounds = array<i64: 32, 32>}, {pipeline_mode = #tpu.pipeline_mode<synchronous>, transform_indices = @transform_8, window_bounds = array<i64: 32, 128>}, {pipeline_mode = #tpu.pipeline_mode<synchronous>, transform_indices = @transform_9, window_bounds = array<i64: 16, 128>}, {transform_indices = @transform_10, window_bounds = array<i64: 8, 128>}]} {
    %c0 = arith.constant 0 : index
    %c0_0 = arith.constant 0 : index
    %c0_1 = arith.constant 0 : index
    %0 = vector.load %arg3[%c0, %c0_0, %c0_1] : memref<4x70x40xbf16, #tpu.memory_space<vmem>>, vector<1x70x40xbf16>
    %1 = vector.shape_cast %0 : vector<1x70x40xbf16> to vector<70x40xbf16>
    %c1 = arith.constant 1 : index
    %c0_2 = arith.constant 0 : index
    %c0_3 = arith.constant 0 : index
    %2 = vector.load %arg3[%c1, %c0_2, %c0_3] : memref<4x70x40xbf16, #tpu.memory_space<vmem>>, vector<1x70x40xbf16>
    %3 = vector.shape_cast %2 : vector<1x70x40xbf16> to vector<70x40xbf16>
    %c2 = arith.constant 2 : index
    %c0_4 = arith.constant 0 : index
    %c0_5 = arith.constant 0 : index
    %4 = vector.load %arg3[%c2, %c0_4, %c0_5] : memref<4x70x40xbf16, #tpu.memory_space<vmem>>, vector<1x70x40xbf16>
    %5 = vector.shape_cast %4 : vector<1x70x40xbf16> to vector<70x40xbf16>
    %c3 = arith.constant 3 : index
    %c0_6 = arith.constant 0 : index
    %c0_7 = arith.constant 0 : index
    %6 = vector.load %arg3[%c3, %c0_6, %c0_7] : memref<4x70x40xbf16, #tpu.memory_space<vmem>>, vector<1x70x40xbf16>
    %7 = vector.shape_cast %6 : vector<1x70x40xbf16> to vector<70x40xbf16>
    %c8 = arith.constant 8 : index
    %c0_8 = arith.constant 0 : index
    %8 = vector.load %arg10[%c8, %c0_8] : memref<16x128xf32, #tpu.memory_space<vmem>>, vector<1x40xf32>
    %c9 = arith.constant 9 : index
    %c0_9 = arith.constant 0 : index
    %9 = vector.load %arg10[%c9, %c0_9] : memref<16x128xf32, #tpu.memory_space<vmem>>, vector<1x40xf32>
    %c10 = arith.constant 10 : index
    %c0_10 = arith.constant 0 : index
    %10 = vector.load %arg10[%c10, %c0_10] : memref<16x128xf32, #tpu.memory_space<vmem>>, vector<1x40xf32>
    %c11 = arith.constant 11 : index
    %c0_11 = arith.constant 0 : index
    %11 = vector.load %arg10[%c11, %c0_11] : memref<16x128xf32, #tpu.memory_space<vmem>>, vector<1x40xf32>
    %c0_12 = arith.constant 0 : index
    %c0_13 = arith.constant 0 : index
    %c0_14 = arith.constant 0 : index
    %12 = vector.load %arg1[%c0_12, %c0_13, %c0_14] : memref<12x8x70xf32, #tpu.memory_space<vmem>>, vector<1x8x70xf32>
    %13 = vector.shape_cast %12 : vector<1x8x70xf32> to vector<8x70xf32>
    %c0_15 = arith.constant 0 : index
    %c0_16 = arith.constant 0 : index
    %c0_17 = arith.constant 0 : index
    %c0_18 = arith.constant 0 : index
    %14 = vector.load %arg2[%c0_15, %c0_16, %c0_17, %c0_18] : memref<3x12x1x70xf32, #tpu.memory_space<vmem>>, vector<1x1x1x70xf32>
    %15 = vector.shape_cast %14 : vector<1x1x1x70xf32> to vector<1x70xf32>
    %16 = vector.broadcast %15 : vector<1x70xf32> to vector<8x70xf32>
    %17 = arith.mulf %13, %16 : vector<8x70xf32>
    %c1_19 = arith.constant 1 : index
    %c0_20 = arith.constant 0 : index
    %c0_21 = arith.constant 0 : index
    %c0_22 = arith.constant 0 : index
    %18 = vector.load %arg2[%c1_19, %c0_20, %c0_21, %c0_22] : memref<3x12x1x70xf32, #tpu.memory_space<vmem>>, vector<1x1x1x70xf32>
    %19 = vector.shape_cast %18 : vector<1x1x1x70xf32> to vector<1x70xf32>
    %20 = vector.broadcast %19 : vector<1x70xf32> to vector<8x70xf32>
    %21 = arith.addf %17, %20 : vector<8x70xf32>
    %cst = arith.constant 0.000000e+00 : f32
    %22 = vector.broadcast %cst : f32 to vector<8x70xf32>
    %23 = arith.cmpf oge, %21, %22 : vector<8x70xf32>
    %c2_23 = arith.constant 2 : index
    %c0_24 = arith.constant 0 : index
    %c0_25 = arith.constant 0 : index
    %c0_26 = arith.constant 0 : index
    %24 = vector.load %arg2[%c2_23, %c0_24, %c0_25, %c0_26] : memref<3x12x1x70xf32, #tpu.memory_space<vmem>>, vector<1x1x1x70xf32>
    %25 = vector.shape_cast %24 : vector<1x1x1x70xf32> to vector<1x70xf32>
    %26 = vector.broadcast %25 : vector<1x70xf32> to vector<8x70xf32>
    %27 = arith.mulf %26, %21 : vector<8x70xf32>
    %28 = arith.select %23, %21, %27 : vector<8x70xi1>, vector<8x70xf32>
    %29 = arith.truncf %28 : vector<8x70xf32> to vector<8x70xbf16>
    %cst_27 = arith.constant dense<0.000000e+00> : vector<8x40xf32>
    %30 = tpu.matmul %29, %1, %cst_27 {dimension_numbers = #tpu.dot_dimension_numbers<[1], [0], [0], [1], [0, 0, 1, 1], [], []>} : vector<8x70xbf16>, vector<70x40xbf16>, vector<8x40xf32> -> vector<8x40xf32>
    %31 = vector.broadcast %8 : vector<1x40xf32> to vector<8x40xf32>
    %32 = arith.addf %30, %31 : vector<8x40xf32>
    %cst_28 = arith.constant 0.000000e+00 : f32
    %33 = vector.broadcast %cst_28 : f32 to vector<8x40xf32>
    %34 = arith.maximumf %32, %33 : vector<8x40xf32>
    %c1_29 = arith.constant 1 : index
    %c0_30 = arith.constant 0 : index
    %c0_31 = arith.constant 0 : index
    %35 = vector.load %arg1[%c1_29, %c0_30, %c0_31] : memref<12x8x70xf32, #tpu.memory_space<vmem>>, vector<1x8x70xf32>
    %36 = vector.shape_cast %35 : vector<1x8x70xf32> to vector<8x70xf32>
    %c0_32 = arith.constant 0 : index
    %c1_33 = arith.constant 1 : index
    %c0_34 = arith.constant 0 : index
    %c0_35 = arith.constant 0 : index
    %37 = vector.load %arg2[%c0_32, %c1_33, %c0_34, %c0_35] : memref<3x12x1x70xf32, #tpu.memory_space<vmem>>, vector<1x1x1x70xf32>
    %38 = vector.shape_cast %37 : vector<1x1x1x70xf32> to vector<1x70xf32>
    %39 = vector.broadcast %38 : vector<1x70xf32> to vector<8x70xf32>
    %40 = arith.mulf %36, %39 : vector<8x70xf32>
    %c1_36 = arith.constant 1 : index
    %c1_37 = arith.constant 1 : index
    %c0_38 = arith.constant 0 : index
    %c0_39 = arith.constant 0 : index
    %41 = vector.load %arg2[%c1_36, %c1_37, %c0_38, %c0_39] : memref<3x12x1x70xf32, #tpu.memory_space<vmem>>, vector<1x1x1x70xf32>
    %42 = vector.shape_cast %41 : vector<1x1x1x70xf32> to vector<1x70xf32>
    %43 = vector.broadcast %42 : vector<1x70xf32> to vector<8x70xf32>
    %44 = arith.addf %40, %43 : vector<8x70xf32>
    %cst_40 = arith.constant 0.000000e+00 : f32
    %45 = vector.broadcast %cst_40 : f32 to vector<8x70xf32>
    %46 = arith.cmpf oge, %44, %45 : vector<8x70xf32>
    %c2_41 = arith.constant 2 : index
    %c1_42 = arith.constant 1 : index
    %c0_43 = arith.constant 0 : index
    %c0_44 = arith.constant 0 : index
    %47 = vector.load %arg2[%c2_41, %c1_42, %c0_43, %c0_44] : memref<3x12x1x70xf32, #tpu.memory_space<vmem>>, vector<1x1x1x70xf32>
    %48 = vector.shape_cast %47 : vector<1x1x1x70xf32> to vector<1x70xf32>
    %49 = vector.broadcast %48 : vector<1x70xf32> to vector<8x70xf32>
    %50 = arith.mulf %49, %44 : vector<8x70xf32>
    %51 = arith.select %46, %44, %50 : vector<8x70xi1>, vector<8x70xf32>
    %52 = arith.truncf %51 : vector<8x70xf32> to vector<8x70xbf16>
    %cst_45 = arith.constant dense<0.000000e+00> : vector<8x40xf32>
    %53 = tpu.matmul %52, %1, %cst_45 {dimension_numbers = #tpu.dot_dimension_numbers<[1], [0], [0], [1], [0, 0, 1, 1], [], []>} : vector<8x70xbf16>, vector<70x40xbf16>, vector<8x40xf32> -> vector<8x40xf32>
    %54 = vector.broadcast %8 : vector<1x40xf32> to vector<8x40xf32>
    %55 = arith.addf %53, %54 : vector<8x40xf32>
    %cst_46 = arith.constant 0.000000e+00 : f32
    %56 = vector.broadcast %cst_46 : f32 to vector<8x40xf32>
    %57 = arith.maximumf %55, %56 : vector<8x40xf32>
    %c2_47 = arith.constant 2 : index
    %c0_48 = arith.constant 0 : index
    %c0_49 = arith.constant 0 : index
    %58 = vector.load %arg1[%c2_47, %c0_48, %c0_49] : memref<12x8x70xf32, #tpu.memory_space<vmem>>, vector<1x8x70xf32>
    %59 = vector.shape_cast %58 : vector<1x8x70xf32> to vector<8x70xf32>
    %c0_50 = arith.constant 0 : index
    %c2_51 = arith.constant 2 : index
    %c0_52 = arith.constant 0 : index
    %c0_53 = arith.constant 0 : index
    %60 = vector.load %arg2[%c0_50, %c2_51, %c0_52, %c0_53] : memref<3x12x1x70xf32, #tpu.memory_space<vmem>>, vector<1x1x1x70xf32>
    %61 = vector.shape_cast %60 : vector<1x1x1x70xf32> to vector<1x70xf32>
    %62 = vector.broadcast %61 : vector<1x70xf32> to vector<8x70xf32>
    %63 = arith.mulf %59, %62 : vector<8x70xf32>
    %c1_54 = arith.constant 1 : index
    %c2_55 = arith.constant 2 : index
    %c0_56 = arith.constant 0 : index
    %c0_57 = arith.constant 0 : index
    %64 = vector.load %arg2[%c1_54, %c2_55, %c0_56, %c0_57] : memref<3x12x1x70xf32, #tpu.memory_space<vmem>>, vector<1x1x1x70xf32>
    %65 = vector.shape_cast %64 : vector<1x1x1x70xf32> to vector<1x70xf32>
    %66 = vector.broadcast %65 : vector<1x70xf32> to vector<8x70xf32>
    %67 = arith.addf %63, %66 : vector<8x70xf32>
    %cst_58 = arith.constant 0.000000e+00 : f32
    %68 = vector.broadcast %cst_58 : f32 to vector<8x70xf32>
    %69 = arith.cmpf oge, %67, %68 : vector<8x70xf32>
    %c2_59 = arith.constant 2 : index
    %c2_60 = arith.constant 2 : index
    %c0_61 = arith.constant 0 : index
    %c0_62 = arith.constant 0 : index
    %70 = vector.load %arg2[%c2_59, %c2_60, %c0_61, %c0_62] : memref<3x12x1x70xf32, #tpu.memory_space<vmem>>, vector<1x1x1x70xf32>
    %71 = vector.shape_cast %70 : vector<1x1x1x70xf32> to vector<1x70xf32>
    %72 = vector.broadcast %71 : vector<1x70xf32> to vector<8x70xf32>
    %73 = arith.mulf %72, %67 : vector<8x70xf32>
    %74 = arith.select %69, %67, %73 : vector<8x70xi1>, vector<8x70xf32>
    %75 = arith.truncf %74 : vector<8x70xf32> to vector<8x70xbf16>
    %cst_63 = arith.constant dense<0.000000e+00> : vector<8x40xf32>
    %76 = tpu.matmul %75, %1, %cst_63 {dimension_numbers = #tpu.dot_dimension_numbers<[1], [0], [0], [1], [0, 0, 1, 1], [], []>} : vector<8x70xbf16>, vector<70x40xbf16>, vector<8x40xf32> -> vector<8x40xf32>
    %77 = vector.broadcast %8 : vector<1x40xf32> to vector<8x40xf32>
    %78 = arith.addf %76, %77 : vector<8x40xf32>
    %cst_64 = arith.constant 0.000000e+00 : f32
    %79 = vector.broadcast %cst_64 : f32 to vector<8x40xf32>
    %80 = arith.maximumf %78, %79 : vector<8x40xf32>
    %c3_65 = arith.constant 3 : index
    %c0_66 = arith.constant 0 : index
    %c0_67 = arith.constant 0 : index
    %81 = vector.load %arg1[%c3_65, %c0_66, %c0_67] : memref<12x8x70xf32, #tpu.memory_space<vmem>>, vector<1x8x70xf32>
    %82 = vector.shape_cast %81 : vector<1x8x70xf32> to vector<8x70xf32>
    %c0_68 = arith.constant 0 : index
    %c3_69 = arith.constant 3 : index
    %c0_70 = arith.constant 0 : index
    %c0_71 = arith.constant 0 : index
    %83 = vector.load %arg2[%c0_68, %c3_69, %c0_70, %c0_71] : memref<3x12x1x70xf32, #tpu.memory_space<vmem>>, vector<1x1x1x70xf32>
    %84 = vector.shape_cast %83 : vector<1x1x1x70xf32> to vector<1x70xf32>
    %85 = vector.broadcast %84 : vector<1x70xf32> to vector<8x70xf32>
    %86 = arith.mulf %82, %85 : vector<8x70xf32>
    %c1_72 = arith.constant 1 : index
    %c3_73 = arith.constant 3 : index
    %c0_74 = arith.constant 0 : index
    %c0_75 = arith.constant 0 : index
    %87 = vector.load %arg2[%c1_72, %c3_73, %c0_74, %c0_75] : memref<3x12x1x70xf32, #tpu.memory_space<vmem>>, vector<1x1x1x70xf32>
    %88 = vector.shape_cast %87 : vector<1x1x1x70xf32> to vector<1x70xf32>
    %89 = vector.broadcast %88 : vector<1x70xf32> to vector<8x70xf32>
    %90 = arith.addf %86, %89 : vector<8x70xf32>
    %cst_76 = arith.constant 0.000000e+00 : f32
    %91 = vector.broadcast %cst_76 : f32 to vector<8x70xf32>
    %92 = arith.cmpf oge, %90, %91 : vector<8x70xf32>
    %c2_77 = arith.constant 2 : index
    %c3_78 = arith.constant 3 : index
    %c0_79 = arith.constant 0 : index
    %c0_80 = arith.constant 0 : index
    %93 = vector.load %arg2[%c2_77, %c3_78, %c0_79, %c0_80] : memref<3x12x1x70xf32, #tpu.memory_space<vmem>>, vector<1x1x1x70xf32>
    %94 = vector.shape_cast %93 : vector<1x1x1x70xf32> to vector<1x70xf32>
    %95 = vector.broadcast %94 : vector<1x70xf32> to vector<8x70xf32>
    %96 = arith.mulf %95, %90 : vector<8x70xf32>
    %97 = arith.select %92, %90, %96 : vector<8x70xi1>, vector<8x70xf32>
    %98 = arith.truncf %97 : vector<8x70xf32> to vector<8x70xbf16>
    %cst_81 = arith.constant dense<0.000000e+00> : vector<8x40xf32>
    %99 = tpu.matmul %98, %3, %cst_81 {dimension_numbers = #tpu.dot_dimension_numbers<[1], [0], [0], [1], [0, 0, 1, 1], [], []>} : vector<8x70xbf16>, vector<70x40xbf16>, vector<8x40xf32> -> vector<8x40xf32>
    %100 = vector.broadcast %9 : vector<1x40xf32> to vector<8x40xf32>
    %101 = arith.addf %99, %100 : vector<8x40xf32>
    %cst_82 = arith.constant 0.000000e+00 : f32
    %102 = vector.broadcast %cst_82 : f32 to vector<8x40xf32>
    %103 = arith.maximumf %101, %102 : vector<8x40xf32>
    %c4 = arith.constant 4 : index
    %c0_83 = arith.constant 0 : index
    %c0_84 = arith.constant 0 : index
    %104 = vector.load %arg1[%c4, %c0_83, %c0_84] : memref<12x8x70xf32, #tpu.memory_space<vmem>>, vector<1x8x70xf32>
    %105 = vector.shape_cast %104 : vector<1x8x70xf32> to vector<8x70xf32>
    %c0_85 = arith.constant 0 : index
    %c4_86 = arith.constant 4 : index
    %c0_87 = arith.constant 0 : index
    %c0_88 = arith.constant 0 : index
    %106 = vector.load %arg2[%c0_85, %c4_86, %c0_87, %c0_88] : memref<3x12x1x70xf32, #tpu.memory_space<vmem>>, vector<1x1x1x70xf32>
    %107 = vector.shape_cast %106 : vector<1x1x1x70xf32> to vector<1x70xf32>
    %108 = vector.broadcast %107 : vector<1x70xf32> to vector<8x70xf32>
    %109 = arith.mulf %105, %108 : vector<8x70xf32>
    %c1_89 = arith.constant 1 : index
    %c4_90 = arith.constant 4 : index
    %c0_91 = arith.constant 0 : index
    %c0_92 = arith.constant 0 : index
    %110 = vector.load %arg2[%c1_89, %c4_90, %c0_91, %c0_92] : memref<3x12x1x70xf32, #tpu.memory_space<vmem>>, vector<1x1x1x70xf32>
    %111 = vector.shape_cast %110 : vector<1x1x1x70xf32> to vector<1x70xf32>
    %112 = vector.broadcast %111 : vector<1x70xf32> to vector<8x70xf32>
    %113 = arith.addf %109, %112 : vector<8x70xf32>
    %cst_93 = arith.constant 0.000000e+00 : f32
    %114 = vector.broadcast %cst_93 : f32 to vector<8x70xf32>
    %115 = arith.cmpf oge, %113, %114 : vector<8x70xf32>
    %c2_94 = arith.constant 2 : index
    %c4_95 = arith.constant 4 : index
    %c0_96 = arith.constant 0 : index
    %c0_97 = arith.constant 0 : index
    %116 = vector.load %arg2[%c2_94, %c4_95, %c0_96, %c0_97] : memref<3x12x1x70xf32, #tpu.memory_space<vmem>>, vector<1x1x1x70xf32>
    %117 = vector.shape_cast %116 : vector<1x1x1x70xf32> to vector<1x70xf32>
    %118 = vector.broadcast %117 : vector<1x70xf32> to vector<8x70xf32>
    %119 = arith.mulf %118, %113 : vector<8x70xf32>
    %120 = arith.select %115, %113, %119 : vector<8x70xi1>, vector<8x70xf32>
    %121 = arith.truncf %120 : vector<8x70xf32> to vector<8x70xbf16>
    %cst_98 = arith.constant dense<0.000000e+00> : vector<8x40xf32>
    %122 = tpu.matmul %121, %3, %cst_98 {dimension_numbers = #tpu.dot_dimension_numbers<[1], [0], [0], [1], [0, 0, 1, 1], [], []>} : vector<8x70xbf16>, vector<70x40xbf16>, vector<8x40xf32> -> vector<8x40xf32>
    %123 = vector.broadcast %9 : vector<1x40xf32> to vector<8x40xf32>
    %124 = arith.addf %122, %123 : vector<8x40xf32>
    %cst_99 = arith.constant 0.000000e+00 : f32
    %125 = vector.broadcast %cst_99 : f32 to vector<8x40xf32>
    %126 = arith.maximumf %124, %125 : vector<8x40xf32>
    %c5 = arith.constant 5 : index
    %c0_100 = arith.constant 0 : index
    %c0_101 = arith.constant 0 : index
    %127 = vector.load %arg1[%c5, %c0_100, %c0_101] : memref<12x8x70xf32, #tpu.memory_space<vmem>>, vector<1x8x70xf32>
    %128 = vector.shape_cast %127 : vector<1x8x70xf32> to vector<8x70xf32>
    %c0_102 = arith.constant 0 : index
    %c5_103 = arith.constant 5 : index
    %c0_104 = arith.constant 0 : index
    %c0_105 = arith.constant 0 : index
    %129 = vector.load %arg2[%c0_102, %c5_103, %c0_104, %c0_105] : memref<3x12x1x70xf32, #tpu.memory_space<vmem>>, vector<1x1x1x70xf32>
    %130 = vector.shape_cast %129 : vector<1x1x1x70xf32> to vector<1x70xf32>
    %131 = vector.broadcast %130 : vector<1x70xf32> to vector<8x70xf32>
    %132 = arith.mulf %128, %131 : vector<8x70xf32>
    %c1_106 = arith.constant 1 : index
    %c5_107 = arith.constant 5 : index
    %c0_108 = arith.constant 0 : index
    %c0_109 = arith.constant 0 : index
    %133 = vector.load %arg2[%c1_106, %c5_107, %c0_108, %c0_109] : memref<3x12x1x70xf32, #tpu.memory_space<vmem>>, vector<1x1x1x70xf32>
    %134 = vector.shape_cast %133 : vector<1x1x1x70xf32> to vector<1x70xf32>
    %135 = vector.broadcast %134 : vector<1x70xf32> to vector<8x70xf32>
    %136 = arith.addf %132, %135 : vector<8x70xf32>
    %cst_110 = arith.constant 0.000000e+00 : f32
    %137 = vector.broadcast %cst_110 : f32 to vector<8x70xf32>
    %138 = arith.cmpf oge, %136, %137 : vector<8x70xf32>
    %c2_111 = arith.constant 2 : index
    %c5_112 = arith.constant 5 : index
    %c0_113 = arith.constant 0 : index
    %c0_114 = arith.constant 0 : index
    %139 = vector.load %arg2[%c2_111, %c5_112, %c0_113, %c0_114] : memref<3x12x1x70xf32, #tpu.memory_space<vmem>>, vector<1x1x1x70xf32>
    %140 = vector.shape_cast %139 : vector<1x1x1x70xf32> to vector<1x70xf32>
    %141 = vector.broadcast %140 : vector<1x70xf32> to vector<8x70xf32>
    %142 = arith.mulf %141, %136 : vector<8x70xf32>
    %143 = arith.select %138, %136, %142 : vector<8x70xi1>, vector<8x70xf32>
    %144 = arith.truncf %143 : vector<8x70xf32> to vector<8x70xbf16>
    %cst_115 = arith.constant dense<0.000000e+00> : vector<8x40xf32>
    %145 = tpu.matmul %144, %3, %cst_115 {dimension_numbers = #tpu.dot_dimension_numbers<[1], [0], [0], [1], [0, 0, 1, 1], [], []>} : vector<8x70xbf16>, vector<70x40xbf16>, vector<8x40xf32> -> vector<8x40xf32>
    %146 = vector.broadcast %9 : vector<1x40xf32> to vector<8x40xf32>
    %147 = arith.addf %145, %146 : vector<8x40xf32>
    %cst_116 = arith.constant 0.000000e+00 : f32
    %148 = vector.broadcast %cst_116 : f32 to vector<8x40xf32>
    %149 = arith.maximumf %147, %148 : vector<8x40xf32>
    %c6 = arith.constant 6 : index
    %c0_117 = arith.constant 0 : index
    %c0_118 = arith.constant 0 : index
    %150 = vector.load %arg1[%c6, %c0_117, %c0_118] : memref<12x8x70xf32, #tpu.memory_space<vmem>>, vector<1x8x70xf32>
    %151 = vector.shape_cast %150 : vector<1x8x70xf32> to vector<8x70xf32>
    %c0_119 = arith.constant 0 : index
    %c6_120 = arith.constant 6 : index
    %c0_121 = arith.constant 0 : index
    %c0_122 = arith.constant 0 : index
    %152 = vector.load %arg2[%c0_119, %c6_120, %c0_121, %c0_122] : memref<3x12x1x70xf32, #tpu.memory_space<vmem>>, vector<1x1x1x70xf32>
    %153 = vector.shape_cast %152 : vector<1x1x1x70xf32> to vector<1x70xf32>
    %154 = vector.broadcast %153 : vector<1x70xf32> to vector<8x70xf32>
    %155 = arith.mulf %151, %154 : vector<8x70xf32>
    %c1_123 = arith.constant 1 : index
    %c6_124 = arith.constant 6 : index
    %c0_125 = arith.constant 0 : index
    %c0_126 = arith.constant 0 : index
    %156 = vector.load %arg2[%c1_123, %c6_124, %c0_125, %c0_126] : memref<3x12x1x70xf32, #tpu.memory_space<vmem>>, vector<1x1x1x70xf32>
    %157 = vector.shape_cast %156 : vector<1x1x1x70xf32> to vector<1x70xf32>
    %158 = vector.broadcast %157 : vector<1x70xf32> to vector<8x70xf32>
    %159 = arith.addf %155, %158 : vector<8x70xf32>
    %cst_127 = arith.constant 0.000000e+00 : f32
    %160 = vector.broadcast %cst_127 : f32 to vector<8x70xf32>
    %161 = arith.cmpf oge, %159, %160 : vector<8x70xf32>
    %c2_128 = arith.constant 2 : index
    %c6_129 = arith.constant 6 : index
    %c0_130 = arith.constant 0 : index
    %c0_131 = arith.constant 0 : index
    %162 = vector.load %arg2[%c2_128, %c6_129, %c0_130, %c0_131] : memref<3x12x1x70xf32, #tpu.memory_space<vmem>>, vector<1x1x1x70xf32>
    %163 = vector.shape_cast %162 : vector<1x1x1x70xf32> to vector<1x70xf32>
    %164 = vector.broadcast %163 : vector<1x70xf32> to vector<8x70xf32>
    %165 = arith.mulf %164, %159 : vector<8x70xf32>
    %166 = arith.select %161, %159, %165 : vector<8x70xi1>, vector<8x70xf32>
    %167 = arith.truncf %166 : vector<8x70xf32> to vector<8x70xbf16>
    %cst_132 = arith.constant dense<0.000000e+00> : vector<8x40xf32>
    %168 = tpu.matmul %167, %5, %cst_132 {dimension_numbers = #tpu.dot_dimension_numbers<[1], [0], [0], [1], [0, 0, 1, 1], [], []>} : vector<8x70xbf16>, vector<70x40xbf16>, vector<8x40xf32> -> vector<8x40xf32>
    %169 = vector.broadcast %10 : vector<1x40xf32> to vector<8x40xf32>
    %170 = arith.addf %168, %169 : vector<8x40xf32>
    %cst_133 = arith.constant 0.000000e+00 : f32
    %171 = vector.broadcast %cst_133 : f32 to vector<8x40xf32>
    %172 = arith.maximumf %170, %171 : vector<8x40xf32>
    %c7 = arith.constant 7 : index
    %c0_134 = arith.constant 0 : index
    %c0_135 = arith.constant 0 : index
    %173 = vector.load %arg1[%c7, %c0_134, %c0_135] : memref<12x8x70xf32, #tpu.memory_space<vmem>>, vector<1x8x70xf32>
    %174 = vector.shape_cast %173 : vector<1x8x70xf32> to vector<8x70xf32>
    %c0_136 = arith.constant 0 : index
    %c7_137 = arith.constant 7 : index
    %c0_138 = arith.constant 0 : index
    %c0_139 = arith.constant 0 : index
    %175 = vector.load %arg2[%c0_136, %c7_137, %c0_138, %c0_139] : memref<3x12x1x70xf32, #tpu.memory_space<vmem>>, vector<1x1x1x70xf32>
    %176 = vector.shape_cast %175 : vector<1x1x1x70xf32> to vector<1x70xf32>
    %177 = vector.broadcast %176 : vector<1x70xf32> to vector<8x70xf32>
    %178 = arith.mulf %174, %177 : vector<8x70xf32>
    %c1_140 = arith.constant 1 : index
    %c7_141 = arith.constant 7 : index
    %c0_142 = arith.constant 0 : index
    %c0_143 = arith.constant 0 : index
    %179 = vector.load %arg2[%c1_140, %c7_141, %c0_142, %c0_143] : memref<3x12x1x70xf32, #tpu.memory_space<vmem>>, vector<1x1x1x70xf32>
    %180 = vector.shape_cast %179 : vector<1x1x1x70xf32> to vector<1x70xf32>
    %181 = vector.broadcast %180 : vector<1x70xf32> to vector<8x70xf32>
    %182 = arith.addf %178, %181 : vector<8x70xf32>
    %cst_144 = arith.constant 0.000000e+00 : f32
    %183 = vector.broadcast %cst_144 : f32 to vector<8x70xf32>
    %184 = arith.cmpf oge, %182, %183 : vector<8x70xf32>
    %c2_145 = arith.constant 2 : index
    %c7_146 = arith.constant 7 : index
    %c0_147 = arith.constant 0 : index
    %c0_148 = arith.constant 0 : index
    %185 = vector.load %arg2[%c2_145, %c7_146, %c0_147, %c0_148] : memref<3x12x1x70xf32, #tpu.memory_space<vmem>>, vector<1x1x1x70xf32>
    %186 = vector.shape_cast %185 : vector<1x1x1x70xf32> to vector<1x70xf32>
    %187 = vector.broadcast %186 : vector<1x70xf32> to vector<8x70xf32>
    %188 = arith.mulf %187, %182 : vector<8x70xf32>
    %189 = arith.select %184, %182, %188 : vector<8x70xi1>, vector<8x70xf32>
    %190 = arith.truncf %189 : vector<8x70xf32> to vector<8x70xbf16>
    %cst_149 = arith.constant dense<0.000000e+00> : vector<8x40xf32>
    %191 = tpu.matmul %190, %5, %cst_149 {dimension_numbers = #tpu.dot_dimension_numbers<[1], [0], [0], [1], [0, 0, 1, 1], [], []>} : vector<8x70xbf16>, vector<70x40xbf16>, vector<8x40xf32> -> vector<8x40xf32>
    %192 = vector.broadcast %10 : vector<1x40xf32> to vector<8x40xf32>
    %193 = arith.addf %191, %192 : vector<8x40xf32>
    %cst_150 = arith.constant 0.000000e+00 : f32
    %194 = vector.broadcast %cst_150 : f32 to vector<8x40xf32>
    %195 = arith.maximumf %193, %194 : vector<8x40xf32>
    %c8_151 = arith.constant 8 : index
    %c0_152 = arith.constant 0 : index
    %c0_153 = arith.constant 0 : index
    %196 = vector.load %arg1[%c8_151, %c0_152, %c0_153] : memref<12x8x70xf32, #tpu.memory_space<vmem>>, vector<1x8x70xf32>
    %197 = vector.shape_cast %196 : vector<1x8x70xf32> to vector<8x70xf32>
    %c0_154 = arith.constant 0 : index
    %c8_155 = arith.constant 8 : index
    %c0_156 = arith.constant 0 : index
    %c0_157 = arith.constant 0 : index
    %198 = vector.load %arg2[%c0_154, %c8_155, %c0_156, %c0_157] : memref<3x12x1x70xf32, #tpu.memory_space<vmem>>, vector<1x1x1x70xf32>
    %199 = vector.shape_cast %198 : vector<1x1x1x70xf32> to vector<1x70xf32>
    %200 = vector.broadcast %199 : vector<1x70xf32> to vector<8x70xf32>
    %201 = arith.mulf %197, %200 : vector<8x70xf32>
    %c1_158 = arith.constant 1 : index
    %c8_159 = arith.constant 8 : index
    %c0_160 = arith.constant 0 : index
    %c0_161 = arith.constant 0 : index
    %202 = vector.load %arg2[%c1_158, %c8_159, %c0_160, %c0_161] : memref<3x12x1x70xf32, #tpu.memory_space<vmem>>, vector<1x1x1x70xf32>
    %203 = vector.shape_cast %202 : vector<1x1x1x70xf32> to vector<1x70xf32>
    %204 = vector.broadcast %203 : vector<1x70xf32> to vector<8x70xf32>
    %205 = arith.addf %201, %204 : vector<8x70xf32>
    %cst_162 = arith.constant 0.000000e+00 : f32
    %206 = vector.broadcast %cst_162 : f32 to vector<8x70xf32>
    %207 = arith.cmpf oge, %205, %206 : vector<8x70xf32>
    %c2_163 = arith.constant 2 : index
    %c8_164 = arith.constant 8 : index
    %c0_165 = arith.constant 0 : index
    %c0_166 = arith.constant 0 : index
    %208 = vector.load %arg2[%c2_163, %c8_164, %c0_165, %c0_166] : memref<3x12x1x70xf32, #tpu.memory_space<vmem>>, vector<1x1x1x70xf32>
    %209 = vector.shape_cast %208 : vector<1x1x1x70xf32> to vector<1x70xf32>
    %210 = vector.broadcast %209 : vector<1x70xf32> to vector<8x70xf32>
    %211 = arith.mulf %210, %205 : vector<8x70xf32>
    %212 = arith.select %207, %205, %211 : vector<8x70xi1>, vector<8x70xf32>
    %213 = arith.truncf %212 : vector<8x70xf32> to vector<8x70xbf16>
    %cst_167 = arith.constant dense<0.000000e+00> : vector<8x40xf32>
    %214 = tpu.matmul %213, %5, %cst_167 {dimension_numbers = #tpu.dot_dimension_numbers<[1], [0], [0], [1], [0, 0, 1, 1], [], []>} : vector<8x70xbf16>, vector<70x40xbf16>, vector<8x40xf32> -> vector<8x40xf32>
    %215 = vector.broadcast %10 : vector<1x40xf32> to vector<8x40xf32>
    %216 = arith.addf %214, %215 : vector<8x40xf32>
    %cst_168 = arith.constant 0.000000e+00 : f32
    %217 = vector.broadcast %cst_168 : f32 to vector<8x40xf32>
    %218 = arith.maximumf %216, %217 : vector<8x40xf32>
    %c9_169 = arith.constant 9 : index
    %c0_170 = arith.constant 0 : index
    %c0_171 = arith.constant 0 : index
    %219 = vector.load %arg1[%c9_169, %c0_170, %c0_171] : memref<12x8x70xf32, #tpu.memory_space<vmem>>, vector<1x8x70xf32>
    %220 = vector.shape_cast %219 : vector<1x8x70xf32> to vector<8x70xf32>
    %c0_172 = arith.constant 0 : index
    %c9_173 = arith.constant 9 : index
    %c0_174 = arith.constant 0 : index
    %c0_175 = arith.constant 0 : index
    %221 = vector.load %arg2[%c0_172, %c9_173, %c0_174, %c0_175] : memref<3x12x1x70xf32, #tpu.memory_space<vmem>>, vector<1x1x1x70xf32>
    %222 = vector.shape_cast %221 : vector<1x1x1x70xf32> to vector<1x70xf32>
    %223 = vector.broadcast %222 : vector<1x70xf32> to vector<8x70xf32>
    %224 = arith.mulf %220, %223 : vector<8x70xf32>
    %c1_176 = arith.constant 1 : index
    %c9_177 = arith.constant 9 : index
    %c0_178 = arith.constant 0 : index
    %c0_179 = arith.constant 0 : index
    %225 = vector.load %arg2[%c1_176, %c9_177, %c0_178, %c0_179] : memref<3x12x1x70xf32, #tpu.memory_space<vmem>>, vector<1x1x1x70xf32>
    %226 = vector.shape_cast %225 : vector<1x1x1x70xf32> to vector<1x70xf32>
    %227 = vector.broadcast %226 : vector<1x70xf32> to vector<8x70xf32>
    %228 = arith.addf %224, %227 : vector<8x70xf32>
    %cst_180 = arith.constant 0.000000e+00 : f32
    %229 = vector.broadcast %cst_180 : f32 to vector<8x70xf32>
    %230 = arith.cmpf oge, %228, %229 : vector<8x70xf32>
    %c2_181 = arith.constant 2 : index
    %c9_182 = arith.constant 9 : index
    %c0_183 = arith.constant 0 : index
    %c0_184 = arith.constant 0 : index
    %231 = vector.load %arg2[%c2_181, %c9_182, %c0_183, %c0_184] : memref<3x12x1x70xf32, #tpu.memory_space<vmem>>, vector<1x1x1x70xf32>
    %232 = vector.shape_cast %231 : vector<1x1x1x70xf32> to vector<1x70xf32>
    %233 = vector.broadcast %232 : vector<1x70xf32> to vector<8x70xf32>
    %234 = arith.mulf %233, %228 : vector<8x70xf32>
    %235 = arith.select %230, %228, %234 : vector<8x70xi1>, vector<8x70xf32>
    %236 = arith.truncf %235 : vector<8x70xf32> to vector<8x70xbf16>
    %cst_185 = arith.constant dense<0.000000e+00> : vector<8x40xf32>
    %237 = tpu.matmul %236, %7, %cst_185 {dimension_numbers = #tpu.dot_dimension_numbers<[1], [0], [0], [1], [0, 0, 1, 1], [], []>} : vector<8x70xbf16>, vector<70x40xbf16>, vector<8x40xf32> -> vector<8x40xf32>
    %238 = vector.broadcast %11 : vector<1x40xf32> to vector<8x40xf32>
    %239 = arith.addf %237, %238 : vector<8x40xf32>
    %cst_186 = arith.constant 0.000000e+00 : f32
    %240 = vector.broadcast %cst_186 : f32 to vector<8x40xf32>
    %241 = arith.maximumf %239, %240 : vector<8x40xf32>
    %c10_187 = arith.constant 10 : index
    %c0_188 = arith.constant 0 : index
    %c0_189 = arith.constant 0 : index
    %242 = vector.load %arg1[%c10_187, %c0_188, %c0_189] : memref<12x8x70xf32, #tpu.memory_space<vmem>>, vector<1x8x70xf32>
    %243 = vector.shape_cast %242 : vector<1x8x70xf32> to vector<8x70xf32>
    %c0_190 = arith.constant 0 : index
    %c10_191 = arith.constant 10 : index
    %c0_192 = arith.constant 0 : index
    %c0_193 = arith.constant 0 : index
    %244 = vector.load %arg2[%c0_190, %c10_191, %c0_192, %c0_193] : memref<3x12x1x70xf32, #tpu.memory_space<vmem>>, vector<1x1x1x70xf32>
    %245 = vector.shape_cast %244 : vector<1x1x1x70xf32> to vector<1x70xf32>
    %246 = vector.broadcast %245 : vector<1x70xf32> to vector<8x70xf32>
    %247 = arith.mulf %243, %246 : vector<8x70xf32>
    %c1_194 = arith.constant 1 : index
    %c10_195 = arith.constant 10 : index
    %c0_196 = arith.constant 0 : index
    %c0_197 = arith.constant 0 : index
    %248 = vector.load %arg2[%c1_194, %c10_195, %c0_196, %c0_197] : memref<3x12x1x70xf32, #tpu.memory_space<vmem>>, vector<1x1x1x70xf32>
    %249 = vector.shape_cast %248 : vector<1x1x1x70xf32> to vector<1x70xf32>
    %250 = vector.broadcast %249 : vector<1x70xf32> to vector<8x70xf32>
    %251 = arith.addf %247, %250 : vector<8x70xf32>
    %cst_198 = arith.constant 0.000000e+00 : f32
    %252 = vector.broadcast %cst_198 : f32 to vector<8x70xf32>
    %253 = arith.cmpf oge, %251, %252 : vector<8x70xf32>
    %c2_199 = arith.constant 2 : index
    %c10_200 = arith.constant 10 : index
    %c0_201 = arith.constant 0 : index
    %c0_202 = arith.constant 0 : index
    %254 = vector.load %arg2[%c2_199, %c10_200, %c0_201, %c0_202] : memref<3x12x1x70xf32, #tpu.memory_space<vmem>>, vector<1x1x1x70xf32>
    %255 = vector.shape_cast %254 : vector<1x1x1x70xf32> to vector<1x70xf32>
    %256 = vector.broadcast %255 : vector<1x70xf32> to vector<8x70xf32>
    %257 = arith.mulf %256, %251 : vector<8x70xf32>
    %258 = arith.select %253, %251, %257 : vector<8x70xi1>, vector<8x70xf32>
    %259 = arith.truncf %258 : vector<8x70xf32> to vector<8x70xbf16>
    %cst_203 = arith.constant dense<0.000000e+00> : vector<8x40xf32>
    %260 = tpu.matmul %259, %7, %cst_203 {dimension_numbers = #tpu.dot_dimension_numbers<[1], [0], [0], [1], [0, 0, 1, 1], [], []>} : vector<8x70xbf16>, vector<70x40xbf16>, vector<8x40xf32> -> vector<8x40xf32>
    %261 = vector.broadcast %11 : vector<1x40xf32> to vector<8x40xf32>
    %262 = arith.addf %260, %261 : vector<8x40xf32>
    %cst_204 = arith.constant 0.000000e+00 : f32
    %263 = vector.broadcast %cst_204 : f32 to vector<8x40xf32>
    %264 = arith.maximumf %262, %263 : vector<8x40xf32>
    %c11_205 = arith.constant 11 : index
    %c0_206 = arith.constant 0 : index
    %c0_207 = arith.constant 0 : index
    %265 = vector.load %arg1[%c11_205, %c0_206, %c0_207] : memref<12x8x70xf32, #tpu.memory_space<vmem>>, vector<1x8x70xf32>
    %266 = vector.shape_cast %265 : vector<1x8x70xf32> to vector<8x70xf32>
    %c0_208 = arith.constant 0 : index
    %c11_209 = arith.constant 11 : index
    %c0_210 = arith.constant 0 : index
    %c0_211 = arith.constant 0 : index
    %267 = vector.load %arg2[%c0_208, %c11_209, %c0_210, %c0_211] : memref<3x12x1x70xf32, #tpu.memory_space<vmem>>, vector<1x1x1x70xf32>
    %268 = vector.shape_cast %267 : vector<1x1x1x70xf32> to vector<1x70xf32>
    %269 = vector.broadcast %268 : vector<1x70xf32> to vector<8x70xf32>
    %270 = arith.mulf %266, %269 : vector<8x70xf32>
    %c1_212 = arith.constant 1 : index
    %c11_213 = arith.constant 11 : index
    %c0_214 = arith.constant 0 : index
    %c0_215 = arith.constant 0 : index
    %271 = vector.load %arg2[%c1_212, %c11_213, %c0_214, %c0_215] : memref<3x12x1x70xf32, #tpu.memory_space<vmem>>, vector<1x1x1x70xf32>
    %272 = vector.shape_cast %271 : vector<1x1x1x70xf32> to vector<1x70xf32>
    %273 = vector.broadcast %272 : vector<1x70xf32> to vector<8x70xf32>
    %274 = arith.addf %270, %273 : vector<8x70xf32>
    %cst_216 = arith.constant 0.000000e+00 : f32
    %275 = vector.broadcast %cst_216 : f32 to vector<8x70xf32>
    %276 = arith.cmpf oge, %274, %275 : vector<8x70xf32>
    %c2_217 = arith.constant 2 : index
    %c11_218 = arith.constant 11 : index
    %c0_219 = arith.constant 0 : index
    %c0_220 = arith.constant 0 : index
    %277 = vector.load %arg2[%c2_217, %c11_218, %c0_219, %c0_220] : memref<3x12x1x70xf32, #tpu.memory_space<vmem>>, vector<1x1x1x70xf32>
    %278 = vector.shape_cast %277 : vector<1x1x1x70xf32> to vector<1x70xf32>
    %279 = vector.broadcast %278 : vector<1x70xf32> to vector<8x70xf32>
    %280 = arith.mulf %279, %274 : vector<8x70xf32>
    %281 = arith.select %276, %274, %280 : vector<8x70xi1>, vector<8x70xf32>
    %282 = arith.truncf %281 : vector<8x70xf32> to vector<8x70xbf16>
    %cst_221 = arith.constant dense<0.000000e+00> : vector<8x40xf32>
    %283 = tpu.matmul %282, %7, %cst_221 {dimension_numbers = #tpu.dot_dimension_numbers<[1], [0], [0], [1], [0, 0, 1, 1], [], []>} : vector<8x70xbf16>, vector<70x40xbf16>, vector<8x40xf32> -> vector<8x40xf32>
    %284 = vector.broadcast %11 : vector<1x40xf32> to vector<8x40xf32>
    %285 = arith.addf %283, %284 : vector<8x40xf32>
    %cst_222 = arith.constant 0.000000e+00 : f32
    %286 = vector.broadcast %cst_222 : f32 to vector<8x40xf32>
    %287 = arith.maximumf %285, %286 : vector<8x40xf32>
    %288 = tpu.concatenate %34, %103, %172, %241 in 0 : vector<8x40xf32>, vector<8x40xf32>, vector<8x40xf32>, vector<8x40xf32> -> vector<32x40xf32>
    %289 = tpu.concatenate %57, %126, %195, %264 in 0 : vector<8x40xf32>, vector<8x40xf32>, vector<8x40xf32>, vector<8x40xf32> -> vector<32x40xf32>
    %290 = tpu.concatenate %80, %149, %218, %287 in 0 : vector<8x40xf32>, vector<8x40xf32>, vector<8x40xf32>, vector<8x40xf32> -> vector<32x40xf32>
    %c0_223 = arith.constant 0 : index
    %c0_224 = arith.constant 0 : index
    %291 = vector.load %arg10[%c0_223, %c0_224] : memref<16x128xf32, #tpu.memory_space<vmem>>, vector<1x64xf32>
    %c1_225 = arith.constant 1 : index
    %c0_226 = arith.constant 0 : index
    %292 = vector.load %arg10[%c1_225, %c0_226] : memref<16x128xf32, #tpu.memory_space<vmem>>, vector<1x64xf32>
    %c0_227 = arith.constant 0 : index
    %c0_228 = arith.constant 0 : index
    %c0_229 = arith.constant 0 : index
    %293 = vector.load %arg4[%c0_227, %c0_228, %c0_229] : memref<5x40x64xbf16, #tpu.memory_space<vmem>>, vector<1x40x64xbf16>
    %294 = vector.shape_cast %293 : vector<1x40x64xbf16> to vector<40x64xbf16>
    %295 = arith.truncf %288 : vector<32x40xf32> to vector<32x40xbf16>
    %cst_230 = arith.constant dense<0.000000e+00> : vector<32x64xf32>
    %296 = tpu.matmul %295, %294, %cst_230 {dimension_numbers = #tpu.dot_dimension_numbers<[1], [0], [0], [1], [0, 0, 1, 1], [], []>} : vector<32x40xbf16>, vector<40x64xbf16>, vector<32x64xf32> -> vector<32x64xf32>
    %c1_231 = arith.constant 1 : index
    %c0_232 = arith.constant 0 : index
    %c0_233 = arith.constant 0 : index
    %297 = vector.load %arg4[%c1_231, %c0_232, %c0_233] : memref<5x40x64xbf16, #tpu.memory_space<vmem>>, vector<1x40x64xbf16>
    %298 = vector.shape_cast %297 : vector<1x40x64xbf16> to vector<40x64xbf16>
    %299 = arith.truncf %289 : vector<32x40xf32> to vector<32x40xbf16>
    %cst_234 = arith.constant dense<0.000000e+00> : vector<32x64xf32>
    %300 = tpu.matmul %299, %298, %cst_234 {dimension_numbers = #tpu.dot_dimension_numbers<[1], [0], [0], [1], [0, 0, 1, 1], [], []>} : vector<32x40xbf16>, vector<40x64xbf16>, vector<32x64xf32> -> vector<32x64xf32>
    %301 = arith.addf %296, %300 : vector<32x64xf32>
    %c2_235 = arith.constant 2 : index
    %c0_236 = arith.constant 0 : index
    %c0_237 = arith.constant 0 : index
    %302 = vector.load %arg4[%c2_235, %c0_236, %c0_237] : memref<5x40x64xbf16, #tpu.memory_space<vmem>>, vector<1x40x64xbf16>
    %303 = vector.shape_cast %302 : vector<1x40x64xbf16> to vector<40x64xbf16>
    %304 = arith.truncf %290 : vector<32x40xf32> to vector<32x40xbf16>
    %cst_238 = arith.constant dense<0.000000e+00> : vector<32x64xf32>
    %305 = tpu.matmul %304, %303, %cst_238 {dimension_numbers = #tpu.dot_dimension_numbers<[1], [0], [0], [1], [0, 0, 1, 1], [], []>} : vector<32x40xbf16>, vector<40x64xbf16>, vector<32x64xf32> -> vector<32x64xf32>
    %306 = arith.addf %301, %305 : vector<32x64xf32>
    %307 = vector.broadcast %291 : vector<1x64xf32> to vector<32x64xf32>
    %308 = arith.addf %306, %307 : vector<32x64xf32>
    %cst_239 = arith.constant 0.000000e+00 : f32
    %309 = vector.broadcast %cst_239 : f32 to vector<32x64xf32>
    %310 = arith.maximumf %308, %309 : vector<32x64xf32>
    %c3_240 = arith.constant 3 : index
    %c0_241 = arith.constant 0 : index
    %c0_242 = arith.constant 0 : index
    %311 = vector.load %arg4[%c3_240, %c0_241, %c0_242] : memref<5x40x64xbf16, #tpu.memory_space<vmem>>, vector<1x40x64xbf16>
    %312 = vector.shape_cast %311 : vector<1x40x64xbf16> to vector<40x64xbf16>
    %313 = arith.truncf %288 : vector<32x40xf32> to vector<32x40xbf16>
    %cst_243 = arith.constant dense<0.000000e+00> : vector<32x64xf32>
    %314 = tpu.matmul %313, %312, %cst_243 {dimension_numbers = #tpu.dot_dimension_numbers<[1], [0], [0], [1], [0, 0, 1, 1], [], []>} : vector<32x40xbf16>, vector<40x64xbf16>, vector<32x64xf32> -> vector<32x64xf32>
    %c3_244 = arith.constant 3 : index
    %c0_245 = arith.constant 0 : index
    %c0_246 = arith.constant 0 : index
    %315 = vector.load %arg4[%c3_244, %c0_245, %c0_246] : memref<5x40x64xbf16, #tpu.memory_space<vmem>>, vector<1x40x64xbf16>
    %316 = vector.shape_cast %315 : vector<1x40x64xbf16> to vector<40x64xbf16>
    %317 = arith.truncf %289 : vector<32x40xf32> to vector<32x40xbf16>
    %cst_247 = arith.constant dense<0.000000e+00> : vector<32x64xf32>
    %318 = tpu.matmul %317, %316, %cst_247 {dimension_numbers = #tpu.dot_dimension_numbers<[1], [0], [0], [1], [0, 0, 1, 1], [], []>} : vector<32x40xbf16>, vector<40x64xbf16>, vector<32x64xf32> -> vector<32x64xf32>
    %c4_248 = arith.constant 4 : index
    %c0_249 = arith.constant 0 : index
    %c0_250 = arith.constant 0 : index
    %319 = vector.load %arg4[%c4_248, %c0_249, %c0_250] : memref<5x40x64xbf16, #tpu.memory_space<vmem>>, vector<1x40x64xbf16>
    %320 = vector.shape_cast %319 : vector<1x40x64xbf16> to vector<40x64xbf16>
    %321 = arith.truncf %289 : vector<32x40xf32> to vector<32x40xbf16>
    %cst_251 = arith.constant dense<0.000000e+00> : vector<32x64xf32>
    %322 = tpu.matmul %321, %320, %cst_251 {dimension_numbers = #tpu.dot_dimension_numbers<[1], [0], [0], [1], [0, 0, 1, 1], [], []>} : vector<32x40xbf16>, vector<40x64xbf16>, vector<32x64xf32> -> vector<32x64xf32>
    %c4_252 = arith.constant 4 : index
    %c0_253 = arith.constant 0 : index
    %c0_254 = arith.constant 0 : index
    %323 = vector.load %arg4[%c4_252, %c0_253, %c0_254] : memref<5x40x64xbf16, #tpu.memory_space<vmem>>, vector<1x40x64xbf16>
    %324 = vector.shape_cast %323 : vector<1x40x64xbf16> to vector<40x64xbf16>
    %325 = arith.truncf %290 : vector<32x40xf32> to vector<32x40xbf16>
    %cst_255 = arith.constant dense<0.000000e+00> : vector<32x64xf32>
    %326 = tpu.matmul %325, %324, %cst_255 {dimension_numbers = #tpu.dot_dimension_numbers<[1], [0], [0], [1], [0, 0, 1, 1], [], []>} : vector<32x40xbf16>, vector<40x64xbf16>, vector<32x64xf32> -> vector<32x64xf32>
    %327 = arith.addf %314, %322 : vector<32x64xf32>
    %328 = vector.broadcast %292 : vector<1x64xf32> to vector<32x64xf32>
    %329 = arith.addf %327, %328 : vector<32x64xf32>
    %cst_256 = arith.constant 0.000000e+00 : f32
    %330 = vector.broadcast %cst_256 : f32 to vector<32x64xf32>
    %331 = arith.maximumf %329, %330 : vector<32x64xf32>
    %332 = arith.addf %314, %326 : vector<32x64xf32>
    %333 = vector.broadcast %292 : vector<1x64xf32> to vector<32x64xf32>
    %334 = arith.addf %332, %333 : vector<32x64xf32>
    %cst_257 = arith.constant 0.000000e+00 : f32
    %335 = vector.broadcast %cst_257 : f32 to vector<32x64xf32>
    %336 = arith.maximumf %334, %335 : vector<32x64xf32>
    %337 = arith.addf %331, %336 : vector<32x64xf32>
    %338 = arith.addf %318, %326 : vector<32x64xf32>
    %339 = vector.broadcast %292 : vector<1x64xf32> to vector<32x64xf32>
    %340 = arith.addf %338, %339 : vector<32x64xf32>
    %cst_258 = arith.constant 0.000000e+00 : f32
    %341 = vector.broadcast %cst_258 : f32 to vector<32x64xf32>
    %342 = arith.maximumf %340, %341 : vector<32x64xf32>
    %343 = arith.addf %337, %342 : vector<32x64xf32>
    %c0_259 = arith.constant 0 : index
    %c0_260 = arith.constant 0 : index
    %c0_261 = arith.constant 0 : index
    %344 = vector.load %arg5[%c0_259, %c0_260, %c0_261] : memref<2x64x32xbf16, #tpu.memory_space<vmem>>, vector<1x64x32xbf16>
    %345 = vector.shape_cast %344 : vector<1x64x32xbf16> to vector<64x32xbf16>
    %346 = arith.truncf %310 : vector<32x64xf32> to vector<32x64xbf16>
    %cst_262 = arith.constant dense<0.000000e+00> : vector<32x32xf32>
    %347 = tpu.matmul %346, %345, %cst_262 {dimension_numbers = #tpu.dot_dimension_numbers<[1], [0], [0], [1], [0, 0, 1, 1], [], []>} : vector<32x64xbf16>, vector<64x32xbf16>, vector<32x32xf32> -> vector<32x32xf32>
    %c1_263 = arith.constant 1 : index
    %c0_264 = arith.constant 0 : index
    %c0_265 = arith.constant 0 : index
    %348 = vector.load %arg5[%c1_263, %c0_264, %c0_265] : memref<2x64x32xbf16, #tpu.memory_space<vmem>>, vector<1x64x32xbf16>
    %349 = vector.shape_cast %348 : vector<1x64x32xbf16> to vector<64x32xbf16>
    %350 = arith.truncf %343 : vector<32x64xf32> to vector<32x64xbf16>
    %cst_266 = arith.constant dense<0.000000e+00> : vector<32x32xf32>
    %351 = tpu.matmul %350, %349, %cst_266 {dimension_numbers = #tpu.dot_dimension_numbers<[1], [0], [0], [1], [0, 0, 1, 1], [], []>} : vector<32x64xbf16>, vector<64x32xbf16>, vector<32x32xf32> -> vector<32x32xf32>
    %352 = arith.addf %347, %351 : vector<32x32xf32>
    %c2_267 = arith.constant 2 : index
    %c0_268 = arith.constant 0 : index
    %353 = vector.load %arg10[%c2_267, %c0_268] : memref<16x128xf32, #tpu.memory_space<vmem>>, vector<1x32xf32>
    %354 = vector.broadcast %353 : vector<1x32xf32> to vector<32x32xf32>
    %355 = arith.addf %352, %354 : vector<32x32xf32>
    %c0_269 = arith.constant 0 : index
    %c0_270 = arith.constant 0 : index
    %356 = vector.load %arg6[%c0_269, %c0_270] : memref<32x16xbf16, #tpu.memory_space<vmem>>, vector<32x16xbf16>
    %357 = arith.truncf %355 : vector<32x32xf32> to vector<32x32xbf16>
    %cst_271 = arith.constant dense<0.000000e+00> : vector<32x16xf32>
    %358 = tpu.matmul %357, %356, %cst_271 {dimension_numbers = #tpu.dot_dimension_numbers<[1], [0], [0], [1], [0, 0, 1, 1], [], []>} : vector<32x32xbf16>, vector<32x16xbf16>, vector<32x16xf32> -> vector<32x16xf32>
    %c3_272 = arith.constant 3 : index
    %c0_273 = arith.constant 0 : index
    %359 = vector.load %arg10[%c3_272, %c0_273] : memref<16x128xf32, #tpu.memory_space<vmem>>, vector<1x16xf32>
    %360 = vector.broadcast %359 : vector<1x16xf32> to vector<32x16xf32>
    %361 = arith.addf %358, %360 : vector<32x16xf32>
    %362 = math.tanh %361 : vector<32x16xf32>
    %c0_274 = arith.constant 0 : index
    %c0_275 = arith.constant 0 : index
    %363 = vector.load %arg7[%c0_274, %c0_275] : memref<16x8xbf16, #tpu.memory_space<vmem>>, vector<16x8xbf16>
    %364 = arith.truncf %362 : vector<32x16xf32> to vector<32x16xbf16>
    %cst_276 = arith.constant dense<0.000000e+00> : vector<32x8xf32>
    %365 = tpu.matmul %364, %363, %cst_276 {dimension_numbers = #tpu.dot_dimension_numbers<[1], [0], [0], [1], [0, 0, 1, 1], [], []>} : vector<32x16xbf16>, vector<16x8xbf16>, vector<32x8xf32> -> vector<32x8xf32>
    %366 = vector.extract_strided_slice %365 {offsets = [0, 0], sizes = [32, 1], strides = [1, 1]} : vector<32x8xf32> to vector<32x1xf32>
    %367 = vector.extract_strided_slice %366 {offsets = [0, 0], sizes = [8, 1], strides = [1, 1]} : vector<32x1xf32> to vector<8x1xf32>
    %368 = vector.extract_strided_slice %366 {offsets = [8, 0], sizes = [8, 1], strides = [1, 1]} : vector<32x1xf32> to vector<8x1xf32>
    %369 = vector.extract_strided_slice %366 {offsets = [16, 0], sizes = [8, 1], strides = [1, 1]} : vector<32x1xf32> to vector<8x1xf32>
    %370 = vector.extract_strided_slice %366 {offsets = [24, 0], sizes = [8, 1], strides = [1, 1]} : vector<32x1xf32> to vector<8x1xf32>
    %371 = arith.maximumf %367, %368 : vector<8x1xf32>
    %372 = arith.maximumf %371, %369 : vector<8x1xf32>
    %373 = arith.maximumf %372, %370 : vector<8x1xf32>
    %374 = arith.subf %367, %373 : vector<8x1xf32>
    %375 = math.exp %374 : vector<8x1xf32>
    %376 = arith.subf %368, %373 : vector<8x1xf32>
    %377 = math.exp %376 : vector<8x1xf32>
    %378 = arith.subf %369, %373 : vector<8x1xf32>
    %379 = math.exp %378 : vector<8x1xf32>
    %380 = arith.subf %370, %373 : vector<8x1xf32>
    %381 = math.exp %380 : vector<8x1xf32>
    %382 = arith.addf %375, %377 : vector<8x1xf32>
    %383 = arith.addf %382, %379 : vector<8x1xf32>
    %384 = arith.addf %383, %381 : vector<8x1xf32>
    %385 = tpu.reciprocal %384 : vector<8x1xf32> -> vector<8x1xf32>
    %386 = arith.mulf %375, %385 : vector<8x1xf32>
    %387 = vector.extract_strided_slice %355 {offsets = [0, 0], sizes = [8, 32], strides = [1, 1]} : vector<32x32xf32> to vector<8x32xf32>
    %388 = vector.broadcast %386 : vector<8x1xf32> to vector<8x32xf32>
    %389 = arith.mulf %388, %387 : vector<8x32xf32>
    %390 = arith.mulf %377, %385 : vector<8x1xf32>
    %391 = vector.extract_strided_slice %355 {offsets = [8, 0], sizes = [8, 32], strides = [1, 1]} : vector<32x32xf32> to vector<8x32xf32>
    %392 = vector.broadcast %390 : vector<8x1xf32> to vector<8x32xf32>
    %393 = arith.mulf %392, %391 : vector<8x32xf32>
    %394 = arith.addf %389, %393 : vector<8x32xf32>
    %395 = arith.mulf %379, %385 : vector<8x1xf32>
    %396 = vector.extract_strided_slice %355 {offsets = [16, 0], sizes = [8, 32], strides = [1, 1]} : vector<32x32xf32> to vector<8x32xf32>
    %397 = vector.broadcast %395 : vector<8x1xf32> to vector<8x32xf32>
    %398 = arith.mulf %397, %396 : vector<8x32xf32>
    %399 = arith.addf %394, %398 : vector<8x32xf32>
    %400 = arith.mulf %381, %385 : vector<8x1xf32>
    %401 = vector.extract_strided_slice %355 {offsets = [24, 0], sizes = [8, 32], strides = [1, 1]} : vector<32x32xf32> to vector<8x32xf32>
    %402 = vector.broadcast %400 : vector<8x1xf32> to vector<8x32xf32>
    %403 = arith.mulf %402, %401 : vector<8x32xf32>
    %404 = arith.addf %399, %403 : vector<8x32xf32>
    %c0_277 = arith.constant 0 : index
    %c0_278 = arith.constant 0 : index
    %405 = vector.load %arg8[%c0_277, %c0_278] : memref<32x32xbf16, #tpu.memory_space<vmem>>, vector<32x32xbf16>
    %406 = arith.truncf %404 : vector<8x32xf32> to vector<8x32xbf16>
    %cst_279 = arith.constant dense<0.000000e+00> : vector<8x32xf32>
    %407 = tpu.matmul %406, %405, %cst_279 {dimension_numbers = #tpu.dot_dimension_numbers<[1], [0], [0], [1], [0, 0, 1, 1], [], []>} : vector<8x32xbf16>, vector<32x32xbf16>, vector<8x32xf32> -> vector<8x32xf32>
    %c4_280 = arith.constant 4 : index
    %c0_281 = arith.constant 0 : index
    %408 = vector.load %arg10[%c4_280, %c0_281] : memref<16x128xf32, #tpu.memory_space<vmem>>, vector<1x32xf32>
    %409 = vector.broadcast %408 : vector<1x32xf32> to vector<8x32xf32>
    %410 = arith.addf %407, %409 : vector<8x32xf32>
    %cst_282 = arith.constant 0.000000e+00 : f32
    %411 = vector.broadcast %cst_282 : f32 to vector<8x32xf32>
    %412 = arith.maximumf %410, %411 : vector<8x32xf32>
    %c0_283 = arith.constant 0 : index
    %c0_284 = arith.constant 0 : index
    %413 = vector.load %arg9[%c0_283, %c0_284] : memref<32x128xbf16, #tpu.memory_space<vmem>>, vector<32x128xbf16>
    %414 = arith.truncf %412 : vector<8x32xf32> to vector<8x32xbf16>
    %cst_285 = arith.constant dense<0.000000e+00> : vector<8x128xf32>
    %415 = tpu.matmul %414, %413, %cst_285 {dimension_numbers = #tpu.dot_dimension_numbers<[1], [0], [0], [1], [0, 0, 1, 1], [], []>} : vector<8x32xbf16>, vector<32x128xbf16>, vector<8x128xf32> -> vector<8x128xf32>
    %c5_286 = arith.constant 5 : index
    %c0_287 = arith.constant 0 : index
    %416 = vector.load %arg10[%c5_286, %c0_287] : memref<16x128xf32, #tpu.memory_space<vmem>>, vector<1x128xf32>
    %417 = vector.broadcast %416 : vector<1x128xf32> to vector<8x128xf32>
    %418 = arith.addf %415, %417 : vector<8x128xf32>
    %419 = tpu.iota {dimensions = array<i32: 1>} : vector<8x128xi32>
    %c5_i32 = arith.constant 5 : i32
    %420 = vector.broadcast %c5_i32 : i32 to vector<8x128xi32>
    %421 = arith.cmpi slt, %419, %420 : vector<8x128xi32>
    %cst_288 = arith.constant -1.000000e+30 : f32
    %422 = vector.broadcast %cst_288 : f32 to vector<8x128xf32>
    %423 = arith.select %421, %418, %422 : vector<8x128xi1>, vector<8x128xf32>
    %cst_289 = arith.constant dense<0xFF800000> : vector<8xf32>
    %424 = vector.multi_reduction <maximumf>, %423, %cst_289 [1] : vector<8x128xf32> to vector<8xf32>
    %425 = vector.shape_cast %424 : vector<8xf32> to vector<8x1xf32>
    %426 = vector.broadcast %425 : vector<8x1xf32> to vector<8x128xf32>
    %427 = arith.subf %423, %426 : vector<8x128xf32>
    %428 = math.exp %427 : vector<8x128xf32>
    %cst_290 = arith.constant dense<0.000000e+00> : vector<8xf32>
    %429 = vector.multi_reduction <add>, %428, %cst_290 [1] : vector<8x128xf32> to vector<8xf32>
    %430 = vector.shape_cast %429 : vector<8xf32> to vector<8x1xf32>
    %431 = math.log %430 : vector<8x1xf32>
    %432 = arith.addf %431, %425 : vector<8x1xf32>
    %433 = vector.broadcast %432 : vector<8x1xf32> to vector<8x128xf32>
    %434 = arith.subf %423, %433 : vector<8x128xf32>
    %cst_291 = arith.constant 0.000000e+00 : f32
    %435 = vector.broadcast %cst_291 : f32 to vector<8x128xf32>
    %436 = arith.select %421, %434, %435 : vector<8x128xi1>, vector<8x128xf32>
    %c0_292 = arith.constant 0 : index
    %c0_293 = arith.constant 0 : index
    %437 = vector.load %arg11[%c0_292, %c0_293] : memref<8x128xf32, #tpu.memory_space<vmem>>, vector<8x128xf32>
    tpu.vector_store %arg11[%c0_292, %c0_293], %436 {strides = array<i32>} : memref<8x128xf32, #tpu.memory_space<vmem>>, vector<8x128xf32>,
    return
  }
  func.func @transform_0(%arg0: i32) -> (i32, i32, i32) {
    %c0_i32 = arith.constant 0 : i32
    %c0_i32_0 = arith.constant 0 : i32
    %c0_i32_1 = arith.constant 0 : i32
    return %c0_i32, %arg0, %c0_i32_0 : i32, i32, i32
  }
  func.func @transform_1(%arg0: i32) -> (i32, i32, i32, i32) {
    %c0_i32 = arith.constant 0 : i32
    %c0_i32_0 = arith.constant 0 : i32
    %c0_i32_1 = arith.constant 0 : i32
    %c0_i32_2 = arith.constant 0 : i32
    %c0_i32_3 = arith.constant 0 : i32
    return %c0_i32, %c0_i32_0, %c0_i32_1, %c0_i32_2 : i32, i32, i32, i32
  }
  func.func @transform_2(%arg0: i32) -> (i32, i32, i32) {
    %c0_i32 = arith.constant 0 : i32
    %c0_i32_0 = arith.constant 0 : i32
    %c0_i32_1 = arith.constant 0 : i32
    %c0_i32_2 = arith.constant 0 : i32
    return %c0_i32, %c0_i32_0, %c0_i32_1 : i32, i32, i32
  }
  func.func @transform_3(%arg0: i32) -> (i32, i32, i32) {
    %c0_i32 = arith.constant 0 : i32
    %c0_i32_0 = arith.constant 0 : i32
    %c0_i32_1 = arith.constant 0 : i32
    %c0_i32_2 = arith.constant 0 : i32
    return %c0_i32, %c0_i32_0, %c0_i32_1 : i32, i32, i32
  }
  func.func @transform_4(%arg0: i32) -> (i32, i32, i32) {
    %c0_i32 = arith.constant 0 : i32
    %c0_i32_0 = arith.constant 0 : i32
    %c0_i32_1 = arith.constant 0 : i32
    %c0_i32_2 = arith.constant 0 : i32
    return %c0_i32, %c0_i32_0, %c0_i32_1 : i32, i32, i32
  }
  func.func @transform_5(%arg0: i32) -> (i32, i32) {
    %c0_i32 = arith.constant 0 : i32
    %c0_i32_0 = arith.constant 0 : i32
    %c0_i32_1 = arith.constant 0 : i32
    return %c0_i32, %c0_i32_0 : i32, i32
  }
  func.func @transform_6(%arg0: i32) -> (i32, i32) {
    %c0_i32 = arith.constant 0 : i32
    %c0_i32_0 = arith.constant 0 : i32
    %c0_i32_1 = arith.constant 0 : i32
    return %c0_i32, %c0_i32_0 : i32, i32
  }
  func.func @transform_7(%arg0: i32) -> (i32, i32) {
    %c0_i32 = arith.constant 0 : i32
    %c0_i32_0 = arith.constant 0 : i32
    %c0_i32_1 = arith.constant 0 : i32
    return %c0_i32, %c0_i32_0 : i32, i32
  }
  func.func @transform_8(%arg0: i32) -> (i32, i32) {
    %c0_i32 = arith.constant 0 : i32
    %c0_i32_0 = arith.constant 0 : i32
    %c0_i32_1 = arith.constant 0 : i32
    return %c0_i32, %c0_i32_0 : i32, i32
  }
  func.func @transform_9(%arg0: i32) -> (i32, i32) {
    %c0_i32 = arith.constant 0 : i32
    %c0_i32_0 = arith.constant 0 : i32
    %c0_i32_1 = arith.constant 0 : i32
    return %c0_i32, %c0_i32_0 : i32, i32
  }
  func.func @transform_10(%arg0: i32) -> (i32, i32) {
    %c0_i32 = arith.constant 0 : i32
    %c0_i32_0 = arith.constant 0 : i32
    return %arg0, %c0_i32 : i32, i32
  }
}

</mosaic_0001>

<llo_original>
// kernel: net_forward.1
$region0: #{net_forward.1}
  #allocation0 [shape = 'u32[]', space=smem, size = 0x4, offset = 0x4, fixed_abs, tag = 'smem constant byte address 0x4 - core index']
  #allocation1 [shape = 'u32[72,128]{1,0:T(1,128)}', space=vmem, size = 0x9000, scoped, tag = 'internal scratch']
  %s0 = inlined_call_operand.vmem [shape: f32[12,8,70], index: 0, kind: input, shape index: {}]
  %s1 = inlined_call_operand.vmem [shape: f32[3,12,1,70], index: 1, kind: input, shape index: {}]
  %s2 = inlined_call_operand.vmem [shape: bf16[4,70,40], index: 2, kind: input, shape index: {}]
  %s3 = inlined_call_operand.vmem [shape: bf16[5,40,64], index: 3, kind: input, shape index: {}]
  %s4 = inlined_call_operand.vmem [shape: bf16[2,64,32], index: 4, kind: input, shape index: {}]
  %s5 = inlined_call_operand.vmem [shape: bf16[32,16], index: 5, kind: input, shape index: {}]
  %s6 = inlined_call_operand.vmem [shape: bf16[16,8], index: 6, kind: input, shape index: {}]
  %s7 = inlined_call_operand.vmem [shape: bf16[32,32], index: 7, kind: input, shape index: {}]
  %s8 = inlined_call_operand.vmem [shape: bf16[32,128], index: 8, kind: input, shape index: {}]
  %s9 = inlined_call_operand.vmem [shape: f32[16,128], index: 9, kind: input, shape index: {}]
  %s10 = inlined_call_operand.vmem [shape: f32[8,128], index: 10, kind: output, shape index: {}]
  %s11 = sld [smem:[#allocation0]]
  $region50: #{net_forward.1} parent=0
    _
  %s13 = ssub.s32 1, %s11
  %s14 = scalar_select 0, %s13, %s11
  // Predicated region
  $region2: #{net_forward.1} parent=0 // pred_check
    _
  $region3: #{net_forward.1} parent=0 // pred_check_branch
    %16 = sbr.rel (0) target = $region5
  $region4: #{net_forward.1} parent=0 // pred_region
    _
  $region5: #{net_forward.1} parent=0 // pred_fallthru
    _
  // Predicated region
  $region6: #{net_forward.1} parent=0 // pred_check
    _
  $region7: #{net_forward.1} parent=0 // pred_check_branch
    %18 = sbr.rel (0) target = $region9
  $region8: #{net_forward.1} parent=0 // pred_region
    _
  $region9: #{net_forward.1} parent=0 // pred_fallthru
    _
  // Predicated region
  $region10: #{net_forward.1} parent=0 // pred_check
    _
  $region11: #{net_forward.1} parent=0 // pred_check_branch
    %20 = sbr.rel (0) target = $region13
  $region12: #{net_forward.1} parent=0 // pred_region
    _
  $region13: #{net_forward.1} parent=0 // pred_fallthru
    _
  // Predicated region
  $region14: #{net_forward.1} parent=0 // pred_check
    _
  $region15: #{net_forward.1} parent=0 // pred_check_branch
    %22 = sbr.rel (0) target = $region17
  $region16: #{net_forward.1} parent=0 // pred_region
    _
  $region17: #{net_forward.1} parent=0 // pred_fallthru
    _
  // Predicated region
  $region18: #{net_forward.1} parent=0 // pred_check
    _
  $region19: #{net_forward.1} parent=0 // pred_check_branch
    %24 = sbr.rel (0) target = $region21
  $region20: #{net_forward.1} parent=0 // pred_region
    _
  $region21: #{net_forward.1} parent=0 // pred_fallthru
    _
  // Predicated region
  $region22: #{net_forward.1} parent=0 // pred_check
    _
  $region23: #{net_forward.1} parent=0 // pred_check_branch
    %26 = sbr.rel (0) target = $region25
  $region24: #{net_forward.1} parent=0 // pred_region
    _
  $region25: #{net_forward.1} parent=0 // pred_fallthru
    _
  // Predicated region
  $region26: #{net_forward.1} parent=0 // pred_check
    _
  $region27: #{net_forward.1} parent=0 // pred_check_branch
    %28 = sbr.rel (0) target = $region29
  $region28: #{net_forward.1} parent=0 // pred_region
    _
  $region29: #{net_forward.1} parent=0 // pred_fallthru
    _
  // Predicated region
  $region30: #{net_forward.1} parent=0 // pred_check
    _
  $region31: #{net_forward.1} parent=0 // pred_check_branch
    %30 = sbr.rel (0) target = $region33
  $region32: #{net_forward.1} parent=0 // pred_region
    _
  $region33: #{net_forward.1} parent=0 // pred_fallthru
    _
  // Predicated region
  $region34: #{net_forward.1} parent=0 // pred_check
    _
  $region35: #{net_forward.1} parent=0 // pred_check_branch
    %32 = sbr.rel (0) target = $region37
  $region36: #{net_forward.1} parent=0 // pred_region
    _
  $region37: #{net_forward.1} parent=0 // pred_fallthru
    _
  // Predicated region
  $region38: #{net_forward.1} parent=0 // pred_check
    _
  $region39: #{net_forward.1} parent=0 // pred_check_branch
    %34 = sbr.rel (0) target = $region41
  $region40: #{net_forward.1} parent=0 // pred_region
    _
  $region41: #{net_forward.1} parent=0 // pred_fallthru
    _
  %v36 = vld [vmem:[%s2] sm:$0xf]
  %v37 = vld [vmem:[%s2 + $0x4] sm:$0xf]
  %v38 = vld [vmem:[%s2 + $0x8] sm:$0xf]
  %v39 = vld [vmem:[%s2 + $0xc] sm:$0xf]
  %v40 = vld [vmem:[%s2 + $0x10] sm:$0xf]
  %v41 = vld [vmem:[%s2 + $0x14] sm:$0xf]
  %v42 = vld [vmem:[%s2 + $0x18] sm:$0xf]
  %v43 = vld [vmem:[%s2 + $0x1c] sm:$0xf]
  %v44 = vld [vmem:[%s2 + $0x20] sm:$0x7]
  %s45 = scalar_lea.vmem %s2, 36
  %v46 = vld [vmem:[%s45] sm:$0xf]
  %v47 = vld [vmem:[%s45 + $0x4] sm:$0xf]
  %v48 = vld [vmem:[%s45 + $0x8] sm:$0xf]
  %v49 = vld [vmem:[%s45 + $0xc] sm:$0xf]
  %v50 = vld [vmem:[%s45 + $0x10] sm:$0xf]
  %v51 = vld [vmem:[%s45 + $0x14] sm:$0xf]
  %v52 = vld [vmem:[%s45 + $0x18] sm:$0xf]
  %v53 = vld [vmem:[%s45 + $0x1c] sm:$0xf]
  %v54 = vld [vmem:[%s45 + $0x20] sm:$0x7]
  %s55 = scalar_lea.vmem %s2, 72
  %v56 = vld [vmem:[%s55] sm:$0xf]
  %v57 = vld [vmem:[%s55 + $0x4] sm:$0xf]
  %v58 = vld [vmem:[%s55 + $0x8] sm:$0xf]
  %v59 = vld [vmem:[%s55 + $0xc] sm:$0xf]
  %v60 = vld [vmem:[%s55 + $0x10] sm:$0xf]
  %v61 = vld [vmem:[%s55 + $0x14] sm:$0xf]
  %v62 = vld [vmem:[%s55 + $0x18] sm:$0xf]
  %v63 = vld [vmem:[%s55 + $0x1c] sm:$0xf]
  %v64 = vld [vmem:[%s55 + $0x20] sm:$0x7]
  %s65 = scalar_lea.vmem %s2, 108
  %v66 = vld [vmem:[%s65] sm:$0xf]
  %v67 = vld [vmem:[%s65 + $0x4] sm:$0xf]
  %v68 = vld [vmem:[%s65 + $0x8] sm:$0xf]
  %v69 = vld [vmem:[%s65 + $0xc] sm:$0xf]
  %v70 = vld [vmem:[%s65 + $0x10] sm:$0xf]
  %v71 = vld [vmem:[%s65 + $0x14] sm:$0xf]
  %v72 = vld [vmem:[%s65 + $0x18] sm:$0xf]
  %v73 = vld [vmem:[%s65 + $0x1c] sm:$0xf]
  %v74 = vld [vmem:[%s65 + $0x20] sm:$0x7]
  %v75 = vld [vmem:[%s9 + $0x8] sm:$0x1]
  %v76 = vld [vmem:[%s9 + $0x9] sm:$0x1]
  %v77 = vld [vmem:[%s9 + $0xa] sm:$0x1]
  %v78 = vld [vmem:[%s9 + $0xb] sm:$0x1]
  %v79 = vld [vmem:[%s0] sm:$0xff]
  %v80 = vld [vmem:[%s1] sm:$0x1]
  %v82 = vperm.slane %v80, 0
  %v84 = vmul.f32 %v79, %v82
  %s85 = scalar_lea.vmem %s1, 12
  %v86 = vld [vmem:[%s85] sm:$0x1]
  %v88 = vperm.slane %v86, 0
  %v90 = vadd.f32 %v84, %v88
  %vm91 = vcmp.ge.f32.partialorder %v90, 0.0
  %s92 = scalar_lea.vmem %s1, 24
  %v93 = vld [vmem:[%s92] sm:$0x1]
  %v95 = vperm.slane %v93, 0
  %v97 = vmul.f32 %v95, %v90
  %v98 = vsel %vm91, %v90, %v97
  %v99 = vpack.c.bf16 %v98, %v98
  %v100 = vperm.slane %v75, 0
  %v110 = vunpack.c.l.b16 %v36
  %v111 = vunpack.c.l.b16 %v37
  %v112 = vunpack.c.l.b16 %v38
  %v113 = vunpack.c.l.b16 %v39
  %v114 = vunpack.c.l.b16 %v40
  %v115 = vunpack.c.l.b16 %v41
  %v116 = vunpack.c.l.b16 %v42
  %v117 = vunpack.c.l.b16 %v43
  %v118 = vunpack.c.l.b16 %v44
  %v119 = vpack.c.b16 %v111, %v110
  %v120 = vpack.c.b16 %v113, %v112
  %v121 = vpack.c.b16 %v115, %v114
  %v122 = vpack.c.b16 %v117, %v116
  %v123 = vpack.c.b16 %v118, %v118
  %vm128 = vcmask 572416
  %v130 = vsel %vm128, %v99, 0
  %vm132 = vcmask 1042432
  %v134 = vsel %vm132, %v123, 0
  %136 = vmatpush.bf16.msra.mxu0 0
  %137 = vmatpush.bf16.msra.mxu0 0
  %138 = vmatpush.bf16.msra.mxu0 0
  %139 = vmatpush.bf16.msra.mxu0 %v134
  %140 = vmatpush.bf16.msra.mxu0 %v122
  %141 = vmatpush.bf16.msra.mxu0 %v121
  %142 = vmatpush.bf16.msra.mxu0 %v120
  %143 = vmatpush.bf16.msra.mxu0 %v119
  %144 = vmatmul.bf16.gmra.mxu0 %v130
  %v145 = vpop.f32.mrf.mxu0
  %v146 = vadd.f32 %v100, %v145
  %v147 = vpop.f32.mrf.mxu0
  %148 = vdwg.mxu0
  %v149 = vmax.f32 %v146, 0.0
  %s150 = scalar_lea.vmem %s0, 8
  %v151 = vld [vmem:[%s150] sm:$0xff]
  %s152 = scalar_lea.vmem %s1, 1
  %v153 = vld [vmem:[%s152] sm:$0x1]
  %v155 = vperm.slane %v153, 0
  %v157 = vmul.f32 %v151, %v155
  %s158 = scalar_lea.vmem %s1, 13
  %v159 = vld [vmem:[%s158] sm:$0x1]
  %v161 = vperm.slane %v159, 0
  %v163 = vadd.f32 %v157, %v161
  %vm164 = vcmp.ge.f32.partialorder %v163, 0.0
  %s165 = scalar_lea.vmem %s1, 25
  %v166 = vld [vmem:[%s165] sm:$0x1]
  %v168 = vperm.slane %v166, 0
  %v170 = vmul.f32 %v168, %v163
  %v171 = vsel %vm164, %v163, %v170
  %v172 = vpack.c.bf16 %v171, %v171
  %v174 = vsel %vm128, %v172, 0
  %176 = vmatpush.bf16.msra.mxu0 0
  %177 = vmatpush.bf16.msra.mxu0 0
  %178 = vmatpush.bf16.msra.mxu0 0
  %179 = vmatpush.bf16.msra.mxu0 %v134
  %180 = vmatpush.bf16.msra.mxu0 %v122
  %181 = vmatpush.bf16.msra.mxu0 %v121
  %182 = vmatpush.bf16.msra.mxu0 %v120
  %183 = vmatpush.bf16.msra.mxu0 %v119
  %184 = vmatmul.bf16.gmra.mxu0 %v174
  %v185 = vpop.f32.mrf.mxu0
  %v186 = vadd.f32 %v100, %v185
  %v187 = vpop.f32.mrf.mxu0
  %188 = vdwg.mxu0
  %v189 = vmax.f32 %v186, 0.0
  %s190 = scalar_lea.vmem %s0, 16
  %v191 = vld [vmem:[%s190] sm:$0xff]
  %s192 = scalar_lea.vmem %s1, 2
  %v193 = vld [vmem:[%s192] sm:$0x1]
  %v195 = vperm.slane %v193, 0
  %v197 = vmul.f32 %v191, %v195
  %s198 = scalar_lea.vmem %s1, 14
  %v199 = vld [vmem:[%s198] sm:$0x1]
  %v201 = vperm.slane %v199, 0
  %v203 = vadd.f32 %v197, %v201
  %vm204 = vcmp.ge.f32.partialorder %v203, 0.0
  %s205 = scalar_lea.vmem %s1, 26
  %v206 = vld [vmem:[%s205] sm:$0x1]
  %v208 = vperm.slane %v206, 0
  %v210 = vmul.f32 %v208, %v203
  %v211 = vsel %vm204, %v203, %v210
  %v212 = vpack.c.bf16 %v211, %v211
  %v214 = vsel %vm128, %v212, 0
  %216 = vmatpush.bf16.msra.mxu0 0
  %217 = vmatpush.bf16.msra.mxu0 0
  %218 = vmatpush.bf16.msra.mxu0 0
  %219 = vmatpush.bf16.msra.mxu0 %v134
  %220 = vmatpush.bf16.msra.mxu0 %v122
  %221 = vmatpush.bf16.msra.mxu0 %v121
  %222 = vmatpush.bf16.msra.mxu0 %v120
  %223 = vmatpush.bf16.msra.mxu0 %v119
  %224 = vmatmul.bf16.gmra.mxu0 %v214
  %v225 = vpop.f32.mrf.mxu0
  %v226 = vadd.f32 %v100, %v225
  %v227 = vpop.f32.mrf.mxu0
  %228 = vdwg.mxu0
  %v229 = vmax.f32 %v226, 0.0
  %s230 = scalar_lea.vmem %s0, 24
  %v231 = vld [vmem:[%s230] sm:$0xff]
  %s232 = scalar_lea.vmem %s1, 3
  %v233 = vld [vmem:[%s232] sm:$0x1]
  %v235 = vperm.slane %v233, 0
  %v237 = vmul.f32 %v231, %v235
  %s238 = scalar_lea.vmem %s1, 15
  %v239 = vld [vmem:[%s238] sm:$0x1]
  %v241 = vperm.slane %v239, 0
  %v243 = vadd.f32 %v237, %v241
  %vm244 = vcmp.ge.f32.partialorder %v243, 0.0
  %s245 = scalar_lea.vmem %s1, 27
  %v246 = vld [vmem:[%s245] sm:$0x1]
  %v248 = vperm.slane %v246, 0
  %v250 = vmul.f32 %v248, %v243
  %v251 = vsel %vm244, %v243, %v250
  %v252 = vpack.c.bf16 %v251, %v251
  %v253 = vperm.slane %v76, 0
  %v263 = vunpack.c.l.b16 %v46
  %v264 = vunpack.c.l.b16 %v47
  %v265 = vunpack.c.l.b16 %v48
  %v266 = vunpack.c.l.b16 %v49
  %v267 = vunpack.c.l.b16 %v50
  %v268 = vunpack.c.l.b16 %v51
  %v269 = vunpack.c.l.b16 %v52
  %v270 = vunpack.c.l.b16 %v53
  %v271 = vunpack.c.l.b16 %v54
  %v272 = vpack.c.b16 %v264, %v263
  %v273 = vpack.c.b16 %v266, %v265
  %v274 = vpack.c.b16 %v268, %v267
  %v275 = vpack.c.b16 %v270, %v269
  %v276 = vpack.c.b16 %v271, %v271
  %v282 = vsel %vm128, %v252, 0
  %v285 = vsel %vm132, %v276, 0
  %287 = vmatpush.bf16.msra.mxu0 0
  %288 = vmatpush.bf16.msra.mxu0 0
  %289 = vmatpush.bf16.msra.mxu0 0
  %290 = vmatpush.bf16.msra.mxu0 %v285
  %291 = vmatpush.bf16.msra.mxu0 %v275
  %292 = vmatpush.bf16.msra.mxu0 %v274
  %293 = vmatpush.bf16.msra.mxu0 %v273
  %294 = vmatpush.bf16.msra.mxu0 %v272
  %295 = vmatmul.bf16.gmra.mxu0 %v282
  %v296 = vpop.f32.mrf.mxu0
  %v297 = vadd.f32 %v253, %v296
  %v298 = vpop.f32.mrf.mxu0
  %299 = vdwg.mxu0
  %v300 = vmax.f32 %v297, 0.0
  %s301 = scalar_lea.vmem %s0, 32
  %v302 = vld [vmem:[%s301] sm:$0xff]
  %s303 = scalar_lea.vmem %s1, 4
  %v304 = vld [vmem:[%s303] sm:$0x1]
  %v306 = vperm.slane %v304, 0
  %v308 = vmul.f32 %v302, %v306
  %s309 = scalar_lea.vmem %s1, 16
  %v310 = vld [vmem:[%s309] sm:$0x1]
  %v312 = vperm.slane %v310, 0
  %v314 = vadd.f32 %v308, %v312
  %vm315 = vcmp.ge.f32.partialorder %v314, 0.0
  %s316 = scalar_lea.vmem %s1, 28
  %v317 = vld [vmem:[%s316] sm:$0x1]
  %v319 = vperm.slane %v317, 0
  %v321 = vmul.f32 %v319, %v314
  %v322 = vsel %vm315, %v314, %v321
  %v323 = vpack.c.bf16 %v322, %v322
  %v325 = vsel %vm128, %v323, 0
  %327 = vmatpush.bf16.msra.mxu0 0
  %328 = vmatpush.bf16.msra.mxu0 0
  %329 = vmatpush.bf16.msra.mxu0 0
  %330 = vmatpush.bf16.msra.mxu0 %v285
  %331 = vmatpush.bf16.msra.mxu0 %v275
  %332 = vmatpush.bf16.msra.mxu0 %v274
  %333 = vmatpush.bf16.msra.mxu0 %v273
  %334 = vmatpush.bf16.msra.mxu0 %v272
  %335 = vmatmul.bf16.gmra.mxu0 %v325
  %v336 = vpop.f32.mrf.mxu0
  %v337 = vadd.f32 %v253, %v336
  %v338 = vpop.f32.mrf.mxu0
  %339 = vdwg.mxu0
  %v340 = vmax.f32 %v337, 0.0
  %s341 = scalar_lea.vmem %s0, 40
  %v342 = vld [vmem:[%s341] sm:$0xff]
  %s343 = scalar_lea.vmem %s1, 5
  %v344 = vld [vmem:[%s343] sm:$0x1]
  %v346 = vperm.slane %v344, 0
  %v348 = vmul.f32 %v342, %v346
  %s349 = scalar_lea.vmem %s1, 17
  %v350 = vld [vmem:[%s349] sm:$0x1]
  %v352 = vperm.slane %v350, 0
  %v354 = vadd.f32 %v348, %v352
  %vm355 = vcmp.ge.f32.partialorder %v354, 0.0
  %s356 = scalar_lea.vmem %s1, 29
  %v357 = vld [vmem:[%s356] sm:$0x1]
  %v359 = vperm.slane %v357, 0
  %v361 = vmul.f32 %v359, %v354
  %v362 = vsel %vm355, %v354, %v361
  %v363 = vpack.c.bf16 %v362, %v362
  %v365 = vsel %vm128, %v363, 0
  %367 = vmatpush.bf16.msra.mxu0 0
  %368 = vmatpush.bf16.msra.mxu0 0
  %369 = vmatpush.bf16.msra.mxu0 0
  %370 = vmatpush.bf16.msra.mxu0 %v285
  %371 = vmatpush.bf16.msra.mxu0 %v275
  %372 = vmatpush.bf16.msra.mxu0 %v274
  %373 = vmatpush.bf16.msra.mxu0 %v273
  %374 = vmatpush.bf16.msra.mxu0 %v272
  %375 = vmatmul.bf16.gmra.mxu0 %v365
  %v376 = vpop.f32.mrf.mxu0
  %v377 = vadd.f32 %v253, %v376
  %v378 = vpop.f32.mrf.mxu0
  %379 = vdwg.mxu0
  %v380 = vmax.f32 %v377, 0.0
  %s381 = scalar_lea.vmem %s0, 48
  %v382 = vld [vmem:[%s381] sm:$0xff]
  %s383 = scalar_lea.vmem %s1, 6
  %v384 = vld [vmem:[%s383] sm:$0x1]
  %v386 = vperm.slane %v384, 0
  %v388 = vmul.f32 %v382, %v386
  %s389 = scalar_lea.vmem %s1, 18
  %v390 = vld [vmem:[%s389] sm:$0x1]
  %v392 = vperm.slane %v390, 0
  %v394 = vadd.f32 %v388, %v392
  %vm395 = vcmp.ge.f32.partialorder %v394, 0.0
  %s396 = scalar_lea.vmem %s1, 30
  %v397 = vld [vmem:[%s396] sm:$0x1]
  %v399 = vperm.slane %v397, 0
  %v401 = vmul.f32 %v399, %v394
  %v402 = vsel %vm395, %v394, %v401
  %v403 = vpack.c.bf16 %v402, %v402
  %v404 = vperm.slane %v77, 0
  %v414 = vunpack.c.l.b16 %v56
  %v415 = vunpack.c.l.b16 %v57
  %v416 = vunpack.c.l.b16 %v58
  %v417 = vunpack.c.l.b16 %v59
  %v418 = vunpack.c.l.b16 %v60
  %v419 = vunpack.c.l.b16 %v61
  %v420 = vunpack.c.l.b16 %v62
  %v421 = vunpack.c.l.b16 %v63
  %v422 = vunpack.c.l.b16 %v64
  %v423 = vpack.c.b16 %v415, %v414
  %v424 = vpack.c.b16 %v417, %v416
  %v425 = vpack.c.b16 %v419, %v418
  %v426 = vpack.c.b16 %v421, %v420
  %v427 = vpack.c.b16 %v422, %v422
  %v433 = vsel %vm128, %v403, 0
  %v436 = vsel %vm132, %v427, 0
  %438 = vmatpush.bf16.msra.mxu0 0
  %439 = vmatpush.bf16.msra.mxu0 0
  %440 = vmatpush.bf16.msra.mxu0 0
  %441 = vmatpush.bf16.msra.mxu0 %v436
  %442 = vmatpush.bf16.msra.mxu0 %v426
  %443 = vmatpush.bf16.msra.mxu0 %v425
  %444 = vmatpush.bf16.msra.mxu0 %v424
  %445 = vmatpush.bf16.msra.mxu0 %v423
  %446 = vmatmul.bf16.gmra.mxu0 %v433
  %v447 = vpop.f32.mrf.mxu0
  %v448 = vadd.f32 %v404, %v447
  %v449 = vpop.f32.mrf.mxu0
  %450 = vdwg.mxu0
  %v451 = vmax.f32 %v448, 0.0
  %s452 = scalar_lea.vmem %s0, 56
  %v453 = vld [vmem:[%s452] sm:$0xff]
  %s454 = scalar_lea.vmem %s1, 7
  %v455 = vld [vmem:[%s454] sm:$0x1]
  %v457 = vperm.slane %v455, 0
  %v459 = vmul.f32 %v453, %v457
  %s460 = scalar_lea.vmem %s1, 19
  %v461 = vld [vmem:[%s460] sm:$0x1]
  %v463 = vperm.slane %v461, 0
  %v465 = vadd.f32 %v459, %v463
  %vm466 = vcmp.ge.f32.partialorder %v465, 0.0
  %s467 = scalar_lea.vmem %s1, 31
  %v468 = vld [vmem:[%s467] sm:$0x1]
  %v470 = vperm.slane %v468, 0
  %v472 = vmul.f32 %v470, %v465
  %v473 = vsel %vm466, %v465, %v472
  %v474 = vpack.c.bf16 %v473, %v473
  %v476 = vsel %vm128, %v474, 0
  %478 = vmatpush.bf16.msra.mxu0 0
  %479 = vmatpush.bf16.msra.mxu0 0
  %480 = vmatpush.bf16.msra.mxu0 0
  %481 = vmatpush.bf16.msra.mxu0 %v436
  %482 = vmatpush.bf16.msra.mxu0 %v426
  %483 = vmatpush.bf16.msra.mxu0 %v425
  %484 = vmatpush.bf16.msra.mxu0 %v424
  %485 = vmatpush.bf16.msra.mxu0 %v423
  %486 = vmatmul.bf16.gmra.mxu0 %v476
  %v487 = vpop.f32.mrf.mxu0
  %v488 = vadd.f32 %v404, %v487
  %v489 = vpop.f32.mrf.mxu0
  %490 = vdwg.mxu0
  %v491 = vmax.f32 %v488, 0.0
  %s492 = scalar_lea.vmem %s0, 64
  %v493 = vld [vmem:[%s492] sm:$0xff]
  %s494 = scalar_lea.vmem %s1, 8
  %v495 = vld [vmem:[%s494] sm:$0x1]
  %v497 = vperm.slane %v495, 0
  %v499 = vmul.f32 %v493, %v497
  %s500 = scalar_lea.vmem %s1, 20
  %v501 = vld [vmem:[%s500] sm:$0x1]
  %v503 = vperm.slane %v501, 0
  %v505 = vadd.f32 %v499, %v503
  %vm506 = vcmp.ge.f32.partialorder %v505, 0.0
  %s507 = scalar_lea.vmem %s1, 32
  %v508 = vld [vmem:[%s507] sm:$0x1]
  %v510 = vperm.slane %v508, 0
  %v512 = vmul.f32 %v510, %v505
  %v513 = vsel %vm506, %v505, %v512
  %v514 = vpack.c.bf16 %v513, %v513
  %v516 = vsel %vm128, %v514, 0
  %518 = vmatpush.bf16.msra.mxu0 0
  %519 = vmatpush.bf16.msra.mxu0 0
  %520 = vmatpush.bf16.msra.mxu0 0
  %521 = vmatpush.bf16.msra.mxu0 %v436
  %522 = vmatpush.bf16.msra.mxu0 %v426
  %523 = vmatpush.bf16.msra.mxu0 %v425
  %524 = vmatpush.bf16.msra.mxu0 %v424
  %525 = vmatpush.bf16.msra.mxu0 %v423
  %526 = vmatmul.bf16.gmra.mxu0 %v516
  %v527 = vpop.f32.mrf.mxu0
  %v528 = vadd.f32 %v404, %v527
  %v529 = vpop.f32.mrf.mxu0
  %530 = vdwg.mxu0
  %v531 = vmax.f32 %v528, 0.0
  %s532 = scalar_lea.vmem %s0, 72
  %v533 = vld [vmem:[%s532] sm:$0xff]
  %s534 = scalar_lea.vmem %s1, 9
  %v535 = vld [vmem:[%s534] sm:$0x1]
  %v537 = vperm.slane %v535, 0
  %v539 = vmul.f32 %v533, %v537
  %s540 = scalar_lea.vmem %s1, 21
  %v541 = vld [vmem:[%s540] sm:$0x1]
  %v543 = vperm.slane %v541, 0
  %v545 = vadd.f32 %v539, %v543
  %vm546 = vcmp.ge.f32.partialorder %v545, 0.0
  %s547 = scalar_lea.vmem %s1, 33
  %v548 = vld [vmem:[%s547] sm:$0x1]
  %v550 = vperm.slane %v548, 0
  %v552 = vmul.f32 %v550, %v545
  %v553 = vsel %vm546, %v545, %v552
  %v554 = vpack.c.bf16 %v553, %v553
  %v555 = vperm.slane %v78, 0
  %v565 = vunpack.c.l.b16 %v66
  %v566 = vunpack.c.l.b16 %v67
  %v567 = vunpack.c.l.b16 %v68
  %v568 = vunpack.c.l.b16 %v69
  %v569 = vunpack.c.l.b16 %v70
  %v570 = vunpack.c.l.b16 %v71
  %v571 = vunpack.c.l.b16 %v72
  %v572 = vunpack.c.l.b16 %v73
  %v573 = vunpack.c.l.b16 %v74
  %v574 = vpack.c.b16 %v566, %v565
  %v575 = vpack.c.b16 %v568, %v567
  %v576 = vpack.c.b16 %v570, %v569
  %v577 = vpack.c.b16 %v572, %v571
  %v578 = vpack.c.b16 %v573, %v573
  %v584 = vsel %vm128, %v554, 0
  %v587 = vsel %vm132, %v578, 0
  %589 = vmatpush.bf16.msra.mxu0 0
  %590 = vmatpush.bf16.msra.mxu0 0
  %591 = vmatpush.bf16.msra.mxu0 0
  %592 = vmatpush.bf16.msra.mxu0 %v587
  %593 = vmatpush.bf16.msra.mxu0 %v577
  %594 = vmatpush.bf16.msra.mxu0 %v576
  %595 = vmatpush.bf16.msra.mxu0 %v575
  %596 = vmatpush.bf16.msra.mxu0 %v574
  %597 = vmatmul.bf16.gmra.mxu0 %v584
  %v598 = vpop.f32.mrf.mxu0
  %v599 = vadd.f32 %v555, %v598
  %v600 = vpop.f32.mrf.mxu0
  %601 = vdwg.mxu0
  %v602 = vmax.f32 %v599, 0.0
  %s603 = scalar_lea.vmem %s0, 80
  %v604 = vld [vmem:[%s603] sm:$0xff]
  %s605 = scalar_lea.vmem %s1, 10
  %v606 = vld [vmem:[%s605] sm:$0x1]
  %v608 = vperm.slane %v606, 0
  %v610 = vmul.f32 %v604, %v608
  %s611 = scalar_lea.vmem %s1, 22
  %v612 = vld [vmem:[%s611] sm:$0x1]
  %v614 = vperm.slane %v612, 0
  %v616 = vadd.f32 %v610, %v614
  %vm617 = vcmp.ge.f32.partialorder %v616, 0.0
  %s618 = scalar_lea.vmem %s1, 34
  %v619 = vld [vmem:[%s618] sm:$0x1]
  %v621 = vperm.slane %v619, 0
  %v623 = vmul.f32 %v621, %v616
  %v624 = vsel %vm617, %v616, %v623
  %v625 = vpack.c.bf16 %v624, %v624
  %v627 = vsel %vm128, %v625, 0
  %629 = vmatpush.bf16.msra.mxu0 0
  %630 = vmatpush.bf16.msra.mxu0 0
  %631 = vmatpush.bf16.msra.mxu0 0
  %632 = vmatpush.bf16.msra.mxu0 %v587
  %633 = vmatpush.bf16.msra.mxu0 %v577
  %634 = vmatpush.bf16.msra.mxu0 %v576
  %635 = vmatpush.bf16.msra.mxu0 %v575
  %636 = vmatpush.bf16.msra.mxu0 %v574
  %637 = vmatmul.bf16.gmra.mxu0 %v627
  %v638 = vpop.f32.mrf.mxu0
  %v639 = vadd.f32 %v555, %v638
  %v640 = vpop.f32.mrf.mxu0
  %641 = vdwg.mxu0
  %v642 = vmax.f32 %v639, 0.0
  %s643 = scalar_lea.vmem %s0, 88
  %v644 = vld [vmem:[%s643] sm:$0xff]
  %s645 = scalar_lea.vmem %s1, 11
  %v646 = vld [vmem:[%s645] sm:$0x1]
  %v648 = vperm.slane %v646, 0
  %v650 = vmul.f32 %v644, %v648
  %s651 = scalar_lea.vmem %s1, 23
  %v652 = vld [vmem:[%s651] sm:$0x1]
  %v654 = vperm.slane %v652, 0
  %v656 = vadd.f32 %v650, %v654
  %vm657 = vcmp.ge.f32.partialorder %v656, 0.0
  %s658 = scalar_lea.vmem %s1, 35
  %v659 = vld [vmem:[%s658] sm:$0x1]
  %v661 = vperm.slane %v659, 0
  %v663 = vmul.f32 %v661, %v656
  %v664 = vsel %vm657, %v656, %v663
  %v665 = vpack.c.bf16 %v664, %v664
  %v667 = vsel %vm128, %v665, 0
  %669 = vmatpush.bf16.msra.mxu0 0
  %670 = vmatpush.bf16.msra.mxu0 0
  %671 = vmatpush.bf16.msra.mxu0 0
  %672 = vmatpush.bf16.msra.mxu0 %v587
  %673 = vmatpush.bf16.msra.mxu0 %v577
  %674 = vmatpush.bf16.msra.mxu0 %v576
  %675 = vmatpush.bf16.msra.mxu0 %v575
  %676 = vmatpush.bf16.msra.mxu0 %v574
  %677 = vmatmul.bf16.gmra.mxu0 %v667
  %v678 = vpop.f32.mrf.mxu0
  %v679 = vadd.f32 %v555, %v678
  %v680 = vpop.f32.mrf.mxu0
  %681 = vdwg.mxu0
  %v682 = vmax.f32 %v679, 0.0
  %v683 = vld [vmem:[%s9] sm:$0x1]
  %v684 = vld [vmem:[%s9 + $0x1] sm:$0x1]
  %v685 = vld [vmem:[%s3] sm:$0xf]
  %v686 = vld [vmem:[%s3 + $0x4] sm:$0xf]
  %v687 = vld [vmem:[%s3 + $0x8] sm:$0xf]
  %v688 = vld [vmem:[%s3 + $0xc] sm:$0xf]
  %v689 = vld [vmem:[%s3 + $0x10] sm:$0xf]
  %v690 = vpack.c.bf16 %v300, %v149
  %v691 = vpack.c.bf16 %v602, %v451
  %s692 = scalar_lea.vmem %s3, 20
  %v693 = vld [vmem:[%s692] sm:$0xf]
  %v694 = vld [vmem:[%s692 + $0x4] sm:$0xf]
  %v695 = vld [vmem:[%s692 + $0x8] sm:$0xf]
  %v696 = vld [vmem:[%s692 + $0xc] sm:$0xf]
  %v697 = vld [vmem:[%s692 + $0x10] sm:$0xf]
  %v698 = vpack.c.bf16 %v340, %v189
  %v699 = vpack.c.bf16 %v642, %v491
  %v705 = vunpack.c.l.b16 %v693
  %v706 = vunpack.c.l.b16 %v694
  %v707 = vunpack.c.l.b16 %v695
  %v708 = vunpack.c.l.b16 %v696
  %v709 = vunpack.c.l.b16 %v697
  %v710 = vpack.c.b16 %v706, %v705
  %v711 = vpack.c.b16 %v708, %v707
  %v712 = vpack.c.b16 %v709, %v709
  %vm715 = vcmask 326656
  %v717 = vsel %vm715, %v698, 0
  %v720 = vsel %vm715, %v699, 0
  %vm722 = vcmask 1043456
  %v724 = vsel %vm722, %v712, 0
  %726 = vmatpush.bf16.msra.mxu0 0
  %727 = vmatpush.bf16.msra.mxu0 0
  %728 = vmatpush.bf16.msra.mxu0 0
  %729 = vmatpush.bf16.msra.mxu0 0
  %730 = vmatpush.bf16.msra.mxu0 0
  %731 = vmatpush.bf16.msra.mxu0 %v724
  %732 = vmatpush.bf16.msra.mxu0 %v711
  %733 = vmatpush.bf16.msra.mxu0 %v710
  %734 = vmatmul.bf16.gmra.mxu0 %v717
  %v735 = vpop.f32.mrf.mxu0
  %v736 = vadd.f32 0.0, %v735
  %v737 = vpop.f32.mrf.mxu0
  %v738 = vadd.f32 0.0, %v737
  %739 = vmatmul.bf16.gmra.mxu0 %v720
  %v740 = vpop.f32.mrf.mxu0
  %v741 = vadd.f32 0.0, %v740
  %v742 = vpop.f32.mrf.mxu0
  %v743 = vadd.f32 0.0, %v742
  %744 = vdwg.mxu0
  %v750 = vunpack.c.l.b16 %v685
  %v751 = vunpack.c.l.b16 %v686
  %v752 = vunpack.c.l.b16 %v687
  %v753 = vunpack.c.l.b16 %v688
  %v754 = vunpack.c.l.b16 %v689
  %v755 = vpack.c.b16 %v751, %v750
  %v756 = vpack.c.b16 %v753, %v752
  %v757 = vpack.c.b16 %v754, %v754
  %v761 = vsel %vm715, %v690, 0
  %v764 = vsel %vm715, %v691, 0
  %v767 = vsel %vm722, %v757, 0
  %769 = vmatpush.bf16.msra.mxu0 0
  %770 = vmatpush.bf16.msra.mxu0 0
  %771 = vmatpush.bf16.msra.mxu0 0
  %772 = vmatpush.bf16.msra.mxu0 0
  %773 = vmatpush.bf16.msra.mxu0 0
  %774 = vmatpush.bf16.msra.mxu0 %v767
  %775 = vmatpush.bf16.msra.mxu0 %v756
  %776 = vmatpush.bf16.msra.mxu0 %v755
  %777 = vmatmul.bf16.gmra.mxu0 %v761
  %v778 = vpop.f32.mrf.mxu0
  %v779 = vadd.f32 %v736, %v778
  %v780 = vpop.f32.mrf.mxu0
  %v781 = vadd.f32 %v738, %v780
  %782 = vmatmul.bf16.gmra.mxu0 %v764
  %v783 = vpop.f32.mrf.mxu0
  %v784 = vadd.f32 %v741, %v783
  %v785 = vpop.f32.mrf.mxu0
  %v786 = vadd.f32 %v743, %v785
  %787 = vdwg.mxu0
  %s788 = scalar_lea.vmem %s3, 40
  %v789 = vld [vmem:[%s788] sm:$0xf]
  %v790 = vld [vmem:[%s788 + $0x4] sm:$0xf]
  %v791 = vld [vmem:[%s788 + $0x8] sm:$0xf]
  %v792 = vld [vmem:[%s788 + $0xc] sm:$0xf]
  %v793 = vld [vmem:[%s788 + $0x10] sm:$0xf]
  %v794 = vpack.c.bf16 %v380, %v229
  %v795 = vpack.c.bf16 %v682, %v531
  %v801 = vunpack.c.l.b16 %v789
  %v802 = vunpack.c.l.b16 %v790
  %v803 = vunpack.c.l.b16 %v791
  %v804 = vunpack.c.l.b16 %v792
  %v805 = vunpack.c.l.b16 %v793
  %v806 = vpack.c.b16 %v802, %v801
  %v807 = vpack.c.b16 %v804, %v803
  %v808 = vpack.c.b16 %v805, %v805
  %v812 = vsel %vm715, %v794, 0
  %v815 = vsel %vm715, %v795, 0
  %v818 = vsel %vm722, %v808, 0
  %820 = vmatpush.bf16.msra.mxu0 0
  %821 = vmatpush.bf16.msra.mxu0 0
  %822 = vmatpush.bf16.msra.mxu0 0
  %823 = vmatpush.bf16.msra.mxu0 0
  %824 = vmatpush.bf16.msra.mxu0 0
  %825 = vmatpush.bf16.msra.mxu0 %v818
  %826 = vmatpush.bf16.msra.mxu0 %v807
  %827 = vmatpush.bf16.msra.mxu0 %v806
  %828 = vmatmul.bf16.gmra.mxu0 %v812
  %v829 = vpop.f32.mrf.mxu0
  %v830 = vadd.f32 0.0, %v829
  %v831 = vpop.f32.mrf.mxu0
  %v832 = vadd.f32 0.0, %v831
  %833 = vmatmul.bf16.gmra.mxu0 %v815
  %v834 = vpop.f32.mrf.mxu0
  %v835 = vadd.f32 0.0, %v834
  %v836 = vpop.f32.mrf.mxu0
  %v837 = vadd.f32 0.0, %v836
  %838 = vdwg.mxu0
  %v839 = vadd.f32 %v779, %v830
  %v840 = vadd.f32 %v781, %v832
  %v841 = vadd.f32 %v784, %v835
  %v842 = vadd.f32 %v786, %v837
  %v843 = vperm.slane %v683, 0
  %v844 = vadd.f32 %v839, %v843
  %v845 = vadd.f32 %v840, %v843
  %v846 = vadd.f32 %v841, %v843
  %v847 = vadd.f32 %v842, %v843
  %v848 = vmax.f32 %v844, 0.0
  %v849 = vmax.f32 %v845, 0.0
  %v850 = vmax.f32 %v846, 0.0
  %v851 = vmax.f32 %v847, 0.0
  %s852 = scalar_lea.vmem %s3, 60
  %v853 = vld [vmem:[%s852] sm:$0xf]
  %v854 = vld [vmem:[%s852 + $0x4] sm:$0xf]
  %v855 = vld [vmem:[%s852 + $0x8] sm:$0xf]
  %v856 = vld [vmem:[%s852 + $0xc] sm:$0xf]
  %v857 = vld [vmem:[%s852 + $0x10] sm:$0xf]
  %v863 = vunpack.c.l.b16 %v853
  %v864 = vunpack.c.l.b16 %v854
  %v865 = vunpack.c.l.b16 %v855
  %v866 = vunpack.c.l.b16 %v856
  %v867 = vunpack.c.l.b16 %v857
  %v868 = vpack.c.b16 %v864, %v863
  %v869 = vpack.c.b16 %v866, %v865
  %v870 = vpack.c.b16 %v867, %v867
  %v874 = vsel %vm722, %v870, 0
  %876 = vmatpush.bf16.msra.mxu0 0
  %877 = vmatpush.bf16.msra.mxu0 0
  %878 = vmatpush.bf16.msra.mxu0 0
  %879 = vmatpush.bf16.msra.mxu0 0
  %880 = vmatpush.bf16.msra.mxu0 0
  %881 = vmatpush.bf16.msra.mxu0 %v874
  %882 = vmatpush.bf16.msra.mxu0 %v869
  %883 = vmatpush.bf16.msra.mxu0 %v868
  %884 = vmatmul.bf16.gmra.mxu0 %v761
  %v885 = vpop.f32.mrf.mxu0
  %v886 = vadd.f32 0.0, %v885
  %v887 = vpop.f32.mrf.mxu0
  %v888 = vadd.f32 0.0, %v887
  %889 = vmatmul.bf16.gmra.mxu0 %v764
  %v890 = vpop.f32.mrf.mxu0
  %v891 = vadd.f32 0.0, %v890
  %v892 = vpop.f32.mrf.mxu0
  %v893 = vadd.f32 0.0, %v892
  %894 = vdwg.mxu0
  %s895 = scalar_lea.vmem %s3, 80
  %v896 = vld [vmem:[%s895] sm:$0xf]
  %v897 = vld [vmem:[%s895 + $0x4] sm:$0xf]
  %v898 = vld [vmem:[%s895 + $0x8] sm:$0xf]
  %v899 = vld [vmem:[%s895 + $0xc] sm:$0xf]
  %v900 = vld [vmem:[%s895 + $0x10] sm:$0xf]
  %v906 = vunpack.c.l.b16 %v896
  %v907 = vunpack.c.l.b16 %v897
  %v908 = vunpack.c.l.b16 %v898
  %v909 = vunpack.c.l.b16 %v899
  %v910 = vunpack.c.l.b16 %v900
  %v911 = vpack.c.b16 %v907, %v906
  %v912 = vpack.c.b16 %v909, %v908
  %v913 = vpack.c.b16 %v910, %v910
  %v917 = vsel %vm722, %v913, 0
  %919 = vmatpush.bf16.msra.mxu0 0
  %920 = vmatpush.bf16.msra.mxu0 0
  %921 = vmatpush.bf16.msra.mxu0 0
  %922 = vmatpush.bf16.msra.mxu0 0
  %923 = vmatpush.bf16.msra.mxu0 0
  %924 = vmatpush.bf16.msra.mxu0 %v917
  %925 = vmatpush.bf16.msra.mxu0 %v912
  %926 = vmatpush.bf16.msra.mxu0 %v911
  %927 = vmatmul.bf16.gmra.mxu0 %v717
  %v928 = vpop.f32.mrf.mxu0
  %v929 = vadd.f32 0.0, %v928
  %v930 = vpop.f32.mrf.mxu0
  %v931 = vadd.f32 0.0, %v930
  %932 = vmatmul.bf16.gmra.mxu0 %v720
  %v933 = vpop.f32.mrf.mxu0
  %v934 = vadd.f32 0.0, %v933
  %v935 = vpop.f32.mrf.mxu0
  %v936 = vadd.f32 0.0, %v935
  %937 = vdwg.mxu0
  %938 = vmatpush.bf16.msra.mxu0 0
  %939 = vmatpush.bf16.msra.mxu0 0
  %940 = vmatpush.bf16.msra.mxu0 0
  %941 = vmatpush.bf16.msra.mxu0 0
  %942 = vmatpush.bf16.msra.mxu0 0
  %943 = vmatpush.bf16.msra.mxu0 %v917
  %944 = vmatpush.bf16.msra.mxu0 %v912
  %945 = vmatpush.bf16.msra.mxu0 %v911
  %946 = vmatmul.bf16.gmra.mxu0 %v812
  %v947 = vpop.f32.mrf.mxu0
  %v948 = vadd.f32 0.0, %v947
  %v949 = vpop.f32.mrf.mxu0
  %v950 = vadd.f32 0.0, %v949
  %951 = vmatmul.bf16.gmra.mxu0 %v815
  %v952 = vpop.f32.mrf.mxu0
  %v953 = vadd.f32 0.0, %v952
  %v954 = vpop.f32.mrf.mxu0
  %v955 = vadd.f32 0.0, %v954
  %956 = vdwg.mxu0
  %v957 = vadd.f32 %v886, %v929
  %v958 = vadd.f32 %v888, %v931
  %v959 = vadd.f32 %v891, %v934
  %v960 = vadd.f32 %v893, %v936
  %v961 = vperm.slane %v684, 0
  %v962 = vadd.f32 %v957, %v961
  %v963 = vadd.f32 %v958, %v961
  %v964 = vadd.f32 %v959, %v961
  %v965 = vadd.f32 %v960, %v961
  %v966 = vmax.f32 %v962, 0.0
  %v967 = vmax.f32 %v963, 0.0
  %v968 = vmax.f32 %v964, 0.0
  %v969 = vmax.f32 %v965, 0.0
  %v970 = vadd.f32 %v886, %v948
  %v971 = vadd.f32 %v888, %v950
  %v972 = vadd.f32 %v891, %v953
  %v973 = vadd.f32 %v893, %v955
  %v974 = vadd.f32 %v970, %v961
  %v975 = vadd.f32 %v971, %v961
  %v976 = vadd.f32 %v972, %v961
  %v977 = vadd.f32 %v973, %v961
  %v978 = vmax.f32 %v974, 0.0
  %v979 = vmax.f32 %v975, 0.0
  %v980 = vmax.f32 %v976, 0.0
  %v981 = vmax.f32 %v977, 0.0
  %v982 = vadd.f32 %v966, %v978
  %v983 = vadd.f32 %v967, %v979
  %v984 = vadd.f32 %v968, %v980
  %v985 = vadd.f32 %v969, %v981
  %986 = vmatpush.bf16.msra.mxu0 0
  %987 = vmatpush.bf16.msra.mxu0 0
  %988 = vmatpush.bf16.msra.mxu0 0
  %989 = vmatpush.bf16.msra.mxu0 0
  %990 = vmatpush.bf16.msra.mxu0 0
  %991 = vmatpush.bf16.msra.mxu0 %v874
  %992 = vmatpush.bf16.msra.mxu0 %v869
  %993 = vmatpush.bf16.msra.mxu0 %v868
  %994 = vmatmul.bf16.gmra.mxu0 %v717
  %v995 = vpop.f32.mrf.mxu0
  %v996 = vadd.f32 %v948, %v995
  %v997 = vpop.f32.mrf.mxu0
  %v998 = vadd.f32 %v950, %v997
  %999 = vmatmul.bf16.gmra.mxu0 %v720
  %v1000 = vpop.f32.mrf.mxu0
  %v1001 = vadd.f32 %v953, %v1000
  %v1002 = vpop.f32.mrf.mxu0
  %v1003 = vadd.f32 %v955, %v1002
  %1004 = vdwg.mxu0
  %v1005 = vadd.f32 %v996, %v961
  %v1006 = vadd.f32 %v998, %v961
  %v1007 = vadd.f32 %v1001, %v961
  %v1008 = vadd.f32 %v1003, %v961
  %v1009 = vmax.f32 %v1005, 0.0
  %v1010 = vmax.f32 %v1006, 0.0
  %v1011 = vmax.f32 %v1007, 0.0
  %v1012 = vmax.f32 %v1008, 0.0
  %v1013 = vadd.f32 %v982, %v1009
  %v1014 = vadd.f32 %v983, %v1010
  %v1015 = vadd.f32 %v984, %v1011
  %v1016 = vadd.f32 %v985, %v1012
  %v1017 = vld [vmem:[%s4] sm:$0xf]
  %v1018 = vld [vmem:[%s4 + $0x4] sm:$0xf]
  %v1019 = vld [vmem:[%s4 + $0x8] sm:$0xf]
  %v1020 = vld [vmem:[%s4 + $0xc] sm:$0xf]
  %v1021 = vld [vmem:[%s4 + $0x10] sm:$0xf]
  %v1022 = vld [vmem:[%s4 + $0x14] sm:$0xf]
  %v1023 = vld [vmem:[%s4 + $0x18] sm:$0xf]
  %v1024 = vld [vmem:[%s4 + $0x1c] sm:$0xf]
  %v1025 = vpack.c.bf16 %v849, %v848
  %v1026 = vpack.c.bf16 %v851, %v850
  %s1027 = scalar_lea.vmem %s4, 32
  %v1028 = vld [vmem:[%s1027] sm:$0xf]
  %v1029 = vld [vmem:[%s1027 + $0x4] sm:$0xf]
  %v1030 = vld [vmem:[%s1027 + $0x8] sm:$0xf]
  %v1031 = vld [vmem:[%s1027 + $0xc] sm:$0xf]
  %v1032 = vld [vmem:[%s1027 + $0x10] sm:$0xf]
  %v1033 = vld [vmem:[%s1027 + $0x14] sm:$0xf]
  %v1034 = vld [vmem:[%s1027 + $0x18] sm:$0xf]
  %v1035 = vld [vmem:[%s1027 + $0x1c] sm:$0xf]
  %v1036 = vpack.c.bf16 %v1014, %v1013
  %v1037 = vpack.c.bf16 %v1016, %v1015
  %v1046 = vunpack.c.l.b16 %v1028
  %v1047 = vunpack.c.l.b16 %v1029
  %v1048 = vunpack.c.l.b16 %v1030
  %v1049 = vunpack.c.l.b16 %v1031
  %v1050 = vunpack.c.l.b16 %v1032
  %v1051 = vunpack.c.l.b16 %v1033
  %v1052 = vunpack.c.l.b16 %v1034
  %v1053 = vunpack.c.l.b16 %v1035
  %v1054 = vpack.c.b16 %v1047, %v1046
  %v1055 = vpack.c.b16 %v1049, %v1048
  %v1056 = vpack.c.b16 %v1051, %v1050
  %v1057 = vpack.c.b16 %v1053, %v1052
  %vm1062 = vcmask 523264
  %v1064 = vsel %vm1062, %v1036, 0
  %v1067 = vsel %vm1062, %v1037, 0
  %1069 = vmatpush.bf16.msra.mxu0 0
  %1070 = vmatpush.bf16.msra.mxu0 0
  %1071 = vmatpush.bf16.msra.mxu0 0
  %1072 = vmatpush.bf16.msra.mxu0 0
  %1073 = vmatpush.bf16.msra.mxu0 %v1057
  %1074 = vmatpush.bf16.msra.mxu0 %v1056
  %1075 = vmatpush.bf16.msra.mxu0 %v1055
  %1076 = vmatpush.bf16.msra.mxu0 %v1054
  %1077 = vmatmul.bf16.gmra.mxu0 %v1064
  %v1078 = vpop.f32.mrf.mxu0
  %v1079 = vadd.f32 0.0, %v1078
  %v1080 = vpop.f32.mrf.mxu0
  %v1081 = vadd.f32 0.0, %v1080
  %1082 = vmatmul.bf16.gmra.mxu0 %v1067
  %v1083 = vpop.f32.mrf.mxu0
  %v1084 = vadd.f32 0.0, %v1083
  %v1085 = vpop.f32.mrf.mxu0
  %v1086 = vadd.f32 0.0, %v1085
  %1087 = vdwg.mxu0
  %v1096 = vunpack.c.l.b16 %v1017
  %v1097 = vunpack.c.l.b16 %v1018
  %v1098 = vunpack.c.l.b16 %v1019
  %v1099 = vunpack.c.l.b16 %v1020
  %v1100 = vunpack.c.l.b16 %v1021
  %v1101 = vunpack.c.l.b16 %v1022
  %v1102 = vunpack.c.l.b16 %v1023
  %v1103 = vunpack.c.l.b16 %v1024
  %v1104 = vpack.c.b16 %v1097, %v1096
  %v1105 = vpack.c.b16 %v1099, %v1098
  %v1106 = vpack.c.b16 %v1101, %v1100
  %v1107 = vpack.c.b16 %v1103, %v1102
  %v1113 = vsel %vm1062, %v1025, 0
  %v1116 = vsel %vm1062, %v1026, 0
  %1118 = vmatpush.bf16.msra.mxu0 0
  %1119 = vmatpush.bf16.msra.mxu0 0
  %1120 = vmatpush.bf16.msra.mxu0 0
  %1121 = vmatpush.bf16.msra.mxu0 0
  %1122 = vmatpush.bf16.msra.mxu0 %v1107
  %1123 = vmatpush.bf16.msra.mxu0 %v1106
  %1124 = vmatpush.bf16.msra.mxu0 %v1105
  %1125 = vmatpush.bf16.msra.mxu0 %v1104
  %1126 = vmatmul.bf16.gmra.mxu0 %v1113
  %v1127 = vpop.f32.mrf.mxu0
  %v1128 = vadd.f32 %v1079, %v1127
  %v1129 = vpop.f32.mrf.mxu0
  %v1130 = vadd.f32 %v1081, %v1129
  %1131 = vmatmul.bf16.gmra.mxu0 %v1116
  %v1132 = vpop.f32.mrf.mxu0
  %v1133 = vadd.f32 %v1084, %v1132
  %v1134 = vpop.f32.mrf.mxu0
  %v1135 = vadd.f32 %v1086, %v1134
  %1136 = vdwg.mxu0
  %v1137 = vld [vmem:[%s9 + $0x2] sm:$0x1]
  %v1138 = vperm.slane %v1137, 0
  %v1139 = vadd.f32 %v1128, %v1138
  %v1140 = vadd.f32 %v1130, %v1138
  %v1141 = vadd.f32 %v1133, %v1138
  %v1142 = vadd.f32 %v1135, %v1138
  %v1143 = vld [vmem:[%s5] sm:$0xf]
  %v1144 = vld [vmem:[%s5 + $0x4] sm:$0xf]
  %v1145 = vld [vmem:[%s5 + $0x8] sm:$0xf]
  %v1146 = vld [vmem:[%s5 + $0xc] sm:$0xf]
  %v1147 = vpack.c.bf16 %v1140, %v1139
  %v1148 = vpack.c.bf16 %v1142, %v1141
  %v1149 = vld [vmem:[%s9 + $0x3] sm:$0x1]
  %v1150 = vperm.slane %v1149, 0
  %v1155 = vunpack.c.l.b16 %v1143
  %v1156 = vunpack.c.l.b16 %v1144
  %v1157 = vunpack.c.l.b16 %v1145
  %v1158 = vunpack.c.l.b16 %v1146
  %v1159 = vpack.c.b16 %v1156, %v1155
  %v1160 = vpack.c.b16 %v1158, %v1157
  %vm1163 = vcmask 261120
  %v1165 = vsel %vm1163, %v1147, 0
  %v1168 = vsel %vm1163, %v1148, 0
  %1170 = vmatpush.bf16.msra.mxu0 0
  %1171 = vmatpush.bf16.msra.mxu0 0
  %1172 = vmatpush.bf16.msra.mxu0 0
  %1173 = vmatpush.bf16.msra.mxu0 0
  %1174 = vmatpush.bf16.msra.mxu0 0
  %1175 = vmatpush.bf16.msra.mxu0 0
  %1176 = vmatpush.bf16.msra.mxu0 %v1160
  %1177 = vmatpush.bf16.msra.mxu0 %v1159
  %1178 = vmatmul.bf16.gmra.mxu0 %v1165
  %v1179 = vpop.f32.mrf.mxu0
  %v1180 = vadd.f32 %v1150, %v1179
  %v1181 = vpop.f32.mrf.mxu0
  %v1182 = vadd.f32 %v1150, %v1181
  %1183 = vmatmul.bf16.gmra.mxu0 %v1168
  %v1184 = vpop.f32.mrf.mxu0
  %v1185 = vadd.f32 %v1150, %v1184
  %v1186 = vpop.f32.mrf.mxu0
  %v1187 = vadd.f32 %v1150, %v1186
  %1188 = vdwg.mxu0
  %v1189 = vtanh.pop %v1180
  %v1190 = vtanh.pop %v1182
  %v1191 = vtanh.pop %v1185
  %v1192 = vtanh.pop %v1187
  %v1193 = vld [vmem:[%s6] sm:$0xf]
  %v1194 = vld [vmem:[%s6 + $0x4] sm:$0xf]
  %v1195 = vpack.c.bf16 %v1190, %v1189
  %v1196 = vpack.c.bf16 %v1192, %v1191
  %v1199 = vunpack.c.l.b16 %v1193
  %v1200 = vunpack.c.l.b16 %v1194
  %v1201 = vpack.c.b16 %v1200, %v1199
  %vm1203 = vcmask 130048
  %v1205 = vsel %vm1203, %v1195, 0
  %v1208 = vsel %vm1203, %v1196, 0
  %1210 = vmatpush.bf16.msra.mxu0 0
  %1211 = vmatpush.bf16.msra.mxu0 0
  %1212 = vmatpush.bf16.msra.mxu0 0
  %1213 = vmatpush.bf16.msra.mxu0 0
  %1214 = vmatpush.bf16.msra.mxu0 0
  %1215 = vmatpush.bf16.msra.mxu0 0
  %1216 = vmatpush.bf16.msra.mxu0 0
  %1217 = vmatpush.bf16.msra.mxu0 %v1201
  %1218 = vmatmul.bf16.gmra.mxu0 %v1205
  %v1219 = vpop.f32.mrf.mxu0
  %v1220 = vadd.f32 0.0, %v1219
  %v1221 = vpop.f32.mrf.mxu0
  %v1222 = vadd.f32 0.0, %v1221
  %1223 = vmatmul.bf16.gmra.mxu0 %v1208
  %v1224 = vpop.f32.mrf.mxu0
  %v1225 = vadd.f32 0.0, %v1224
  %v1226 = vpop.f32.mrf.mxu0
  %v1227 = vadd.f32 0.0, %v1226
  %1228 = vdwg.mxu0
  %v1229 = vmax.f32 %v1220, %v1222
  %v1230 = vmax.f32 %v1229, %v1225
  %v1231 = vmax.f32 %v1230, %v1227
  %v1232 = vsub.f32 %v1220, %v1231
  %v1233 = vmul.f32 %v1232, 1.442695
  %v1234 = vpow.pop %v1233
  %v1235 = vsub.f32 %v1222, %v1231
  %v1236 = vmul.f32 %v1235, 1.442695
  %v1237 = vpow.pop %v1236
  %v1238 = vsub.f32 %v1225, %v1231
  %v1239 = vmul.f32 %v1238, 1.442695
  %v1240 = vpow.pop %v1239
  %v1241 = vsub.f32 %v1227, %v1231
  %v1242 = vmul.f32 %v1241, 1.442695
  %v1243 = vpow.pop %v1242
  %v1244 = vadd.f32 %v1234, %v1237
  %v1245 = vadd.f32 %v1244, %v1240
  %v1246 = vadd.f32 %v1245, %v1243
  %v1247 = vrcp.pop %v1246
  %v1248 = vmul.f32 %v1246, %v1247
  %v1249 = vsub.f32 1.0, %v1248
  %v1250 = vmul.f32 %v1247, %v1249
  %v1251 = vadd.f32 %v1247, %v1250
  %vm1252 = vweird.f32 %v1246
  %vm1253 = vweird.f32 %v1247
  %vm1254 = vmor %vm1252, %vm1253
  %v1255 = vsel %vm1254, %v1247, %v1251
  %v1256 = vand.u32 2147483647, %v1246
  %vm1257 = vcmp.eq.f32.partialorder %v1256, 8.507059e+37
  %v1258 = vand.u32 %v1246, 2147483648
  %v1259 = vor.u32 1.1754944e-38, %v1258
  %v1260 = vsel %vm1257, %v1259, %v1255
  %v1261 = vmul.f32 %v1234, %v1260
  %1263 = vset.pattern.permute.xlu0 0
  %1264 = vperm.xlu0 %1263, %v1261
  %v1265 = vpop.permute.xlu0 %1264
  %v1267 = vmul.f32 %v1265, %v1139
  %v1268 = vmul.f32 %v1237, %v1260
  %1270 = vset.pattern.permute.xlu0 0
  %1271 = vperm.xlu0 %1270, %v1268
  %v1272 = vpop.permute.xlu0 %1271
  %v1274 = vmul.f32 %v1272, %v1140
  %v1275 = vadd.f32 %v1267, %v1274
  %v1276 = vmul.f32 %v1240, %v1260
  %1278 = vset.pattern.permute.xlu0 0
  %1279 = vperm.xlu0 %1278, %v1276
  %v1280 = vpop.permute.xlu0 %1279
  %v1282 = vmul.f32 %v1280, %v1141
  %v1283 = vadd.f32 %v1275, %v1282
  %v1284 = vmul.f32 %v1243, %v1260
  %1286 = vset.pattern.permute.xlu0 0
  %1287 = vperm.xlu0 %1286, %v1284
  %v1288 = vpop.permute.xlu0 %1287
  %v1290 = vmul.f32 %v1288, %v1142
  %v1291 = vadd.f32 %v1283, %v1290
  %v1292 = vld [vmem:[%s7] sm:$0xf]
  %v1293 = vld [vmem:[%s7 + $0x4] sm:$0xf]
  %v1294 = vld [vmem:[%s7 + $0x8] sm:$0xf]
  %v1295 = vld [vmem:[%s7 + $0xc] sm:$0xf]
  %v1296 = vpack.c.bf16 %v1291, %v1291
  %v1297 = vld [vmem:[%s9 + $0x4] sm:$0x1]
  %v1298 = vperm.slane %v1297, 0
  %v1303 = vunpack.c.l.b16 %v1292
  %v1304 = vunpack.c.l.b16 %v1293
  %v1305 = vunpack.c.l.b16 %v1294
  %v1306 = vunpack.c.l.b16 %v1295
  %v1307 = vpack.c.b16 %v1304, %v1303
  %v1308 = vpack.c.b16 %v1306, %v1305
  %v1312 = vsel %vm1163, %v1296, 0
  %1314 = vmatpush.bf16.msra.mxu0 0
  %1315 = vmatpush.bf16.msra.mxu0 0
  %1316 = vmatpush.bf16.msra.mxu0 0
  %1317 = vmatpush.bf16.msra.mxu0 0
  %1318 = vmatpush.bf16.msra.mxu0 0
  %1319 = vmatpush.bf16.msra.mxu0 0
  %1320 = vmatpush.bf16.msra.mxu0 %v1308
  %1321 = vmatpush.bf16.msra.mxu0 %v1307
  %1322 = vmatmul.bf16.gmra.mxu0 %v1312
  %v1323 = vpop.f32.mrf.mxu0
  %v1324 = vadd.f32 %v1298, %v1323
  %v1325 = vpop.f32.mrf.mxu0
  %1326 = vdwg.mxu0
  %v1327 = vmax.f32 %v1324, 0.0
  %v1328 = vld [vmem:[%s8] sm:$0xf]
  %v1329 = vld [vmem:[%s8 + $0x4] sm:$0xf]
  %v1330 = vld [vmem:[%s8 + $0x8] sm:$0xf]
  %v1331 = vld [vmem:[%s8 + $0xc] sm:$0xf]
  %v1332 = vpack.c.bf16 %v1327, %v1327
  %v1333 = vld [vmem:[%s9 + $0x5] sm:$0x1]
  %v1334 = vperm.slane %v1333, 0
  %v1339 = vunpack.c.l.b16 %v1328
  %v1340 = vunpack.c.l.b16 %v1329
  %v1341 = vunpack.c.l.b16 %v1330
  %v1342 = vunpack.c.l.b16 %v1331
  %v1343 = vpack.c.b16 %v1340, %v1339
  %v1344 = vpack.c.b16 %v1342, %v1341
  %v1348 = vsel %vm1163, %v1332, 0
  %1350 = vmatpush.bf16.msra.mxu0 0
  %1351 = vmatpush.bf16.msra.mxu0 0
  %1352 = vmatpush.bf16.msra.mxu0 0
  %1353 = vmatpush.bf16.msra.mxu0 0
  %1354 = vmatpush.bf16.msra.mxu0 0
  %1355 = vmatpush.bf16.msra.mxu0 0
  %1356 = vmatpush.bf16.msra.mxu0 %v1344
  %1357 = vmatpush.bf16.msra.mxu0 %v1343
  %1358 = vmatmul.bf16.gmra.mxu0 %v1348
  %v1359 = vpop.f32.mrf.mxu0
  %v1360 = vadd.f32 %v1334, %v1359
  %v1361 = vpop.f32.mrf.mxu0
  %1362 = vdwg.mxu0
  %v1363 = vlaneseq
  %v1364 = vand.u32 %v1363, 127
  %vm1365 = vcmp.lt.s32.totalorder %v1364, 5
  %v1366 = vsel %vm1365, %v1360, -1e+30
  %1367 = vmax.xlane.f32.xlu0 %v1366
  %v1368 = vpop.xlane.xlu0 %1367
  %v1369 = vsub.f32 %v1366, %v1368
  %v1370 = vmul.f32 %v1369, 1.442695
  %v1371 = vpow.pop %v1370
  %1372 = vadd.xlane.f32.xlu0 %v1371
  %v1373 = vpop.xlane.xlu0 %1372
  %v1374 = vlog2.pop %v1373
  %v1375 = vmul.f32 %v1374, 0.6931472
  %v1376 = vadd.f32 %v1375, %v1368
  %v1377 = vsub.f32 %v1366, %v1376
  %v1378 = vsel %vm1365, %v1377, 0.0
  %1379 = vst [vmem:[%s10] sm:$0xff] %v1378
  // Predicated region
  $region42: #{net_forward.1} parent=0 // pred_check
    _
  $region43: #{net_forward.1} parent=0 // pred_check_branch
    %1381 = sbr.rel (0) target = $region45
  $region44: #{net_forward.1} parent=0 // pred_region
    _
  $region45: #{net_forward.1} parent=0 // pred_fallthru
    _
  // Predicated region
  $region46: #{net_forward.1} parent=0 // pred_check
    _
  $region47: #{net_forward.1} parent=0 // pred_check_branch
    %1383 = sbr.rel (0) target = $region49
  $region48: #{net_forward.1} parent=0 // pred_region
    _
  $region49: #{net_forward.1} parent=0 // pred_fallthru
    _

</llo_original>
